<compile_context>
chip_gen: v7x
topology: tpu7x:2x2x1
jax: 0.10.0
libtpu: 0.0.40
codegen_flags: <defaults>
</compile_context>

<pallas_src>
import jax
import jax.numpy as jnp
import numpy as np
from jax import lax
from jax.experimental import pallas as pl
from jax.experimental.pallas import tpu as pltpu

# ---- configuration ------------------------------------------------------------
B = 2
C = 150            # groups=150 in the PyTorch module forces channels % 150 == 0
H = 8
W = 8
KH = KW = 3
EPS = 1e-5
LANES = 128
C_PAD = ((C + LANES - 1) // LANES) * LANES     # 256 -> lane-dense

# Row layout of the packed parameter slab (N_ROWS x C_PAD)
R_W1 = 0           # rows 0..8   : conv1 depthwise taps, row index = kh*3 + kw
R_B1 = 9           # row  9      : conv1 bias
R_W2 = 10          # rows 10..18 : conv2 depthwise taps
R_B2 = 19          # row 19      : conv2 bias
R_BN1 = 20         # rows 20..23 : bn1 gamma, beta, running_mean, running_var
R_BN2 = 24         # rows 24..27 : bn2 gamma, beta, running_mean, running_var
N_ROWS = 32        # padded to a sublane multiple


def residual_kernel(x_ref, w_ref, o_ref):
    x = x_ref[0]                                   # (H, W, C_PAD) f32

    def wrow(i):                                   # (1, C_PAD) parameter row
        return w_ref[i:i + 1, :]

    def dwconv3x3(inp, row0, brow):
        # zero 'same' padding in H and W, then 9 shifted multiply-adds (VPU)
        zrow = jnp.zeros((1, W, C_PAD), jnp.float32)
        xp = jnp.concatenate([zrow, inp, zrow], axis=0)          # (H+2, W,   C)
        zcol = jnp.zeros((H + 2, 1, C_PAD), jnp.float32)
        xp = jnp.concatenate([zcol, xp, zcol], axis=1)           # (H+2, W+2, C)
        acc = jnp.zeros((H, W, C_PAD), jnp.float32) + wrow(brow)  # bias
        for kh in range(KH):
            for kw in range(KW):
                acc = acc + xp[kh:kh + H, kw:kw + W, :] * wrow(row0 + kh * KW + kw)
        return acc

    def batchnorm(inp, row0):
        gamma = wrow(row0)
        beta = wrow(row0 + 1)
        mean = wrow(row0 + 2)
        var = wrow(row0 + 3)
        scale = gamma * lax.rsqrt(var + EPS)       # rsqrt -> EUP (free slot)
        return (inp - mean) * scale + beta

    y = jnp.maximum(batchnorm(dwconv3x3(x, R_W1, R_B1), R_BN1), 0.0)
    y = batchnorm(dwconv3x3(y, R_W2, R_B2), R_BN2)
    o_ref[0] = jnp.maximum(x + y, 0.0)             # lane-dense (256-lane) store


def pack_param_slab(p):
    """Pack every parameter into one (N_ROWS, C_PAD) f32 slab (single DMA)."""
    def row(v, fill=0.0):
        r = jnp.full((C_PAD,), fill, jnp.float32)
        return r.at[:C].set(v.astype(jnp.float32))

    rows = []
    w1 = p["conv1_w"].reshape(C, KH * KW)          # (C, 9), element [c, kh*3+kw]
    rows += [row(w1[:, t]) for t in range(KH * KW)]
    rows.append(row(p["conv1_b"]))
    w2 = p["conv2_w"].reshape(C, KH * KW)
    rows += [row(w2[:, t]) for t in range(KH * KW)]
    rows.append(row(p["conv2_b"]))
    rows += [row(p["bn1_gamma"]), row(p["bn1_beta"]),
             row(p["bn1_mean"]), row(p["bn1_var"], 1.0)]
    rows += [row(p["bn2_gamma"]), row(p["bn2_beta"]),
             row(p["bn2_mean"]), row(p["bn2_var"], 1.0)]
    while len(rows) < N_ROWS:                      # pad rows (unused, zeros)
        rows.append(jnp.zeros((C_PAD,), jnp.float32))
    return jnp.stack(rows, axis=0)


def residual_forward(x_nchw, params):
    slab = pack_param_slab(params)
    # NCHW -> NHWC and pad channels to a lane-dense 256 (layout plumbing only).
    x = jnp.transpose(x_nchw, (0, 2, 3, 1)).astype(jnp.float32)
    x = jnp.pad(x, ((0, 0), (0, 0), (0, 0), (0, C_PAD - C)))
    out = pl.pallas_call(
        residual_kernel,
        out_shape=jax.ShapeDtypeStruct((B, H, W, C_PAD), jnp.float32),
        grid=(B,),
        in_specs=[
            pl.BlockSpec((1, H, W, C_PAD), lambda b: (b, 0, 0, 0)),
            pl.BlockSpec((N_ROWS, C_PAD), lambda b: (0, 0)),
        ],
        out_specs=pl.BlockSpec((1, H, W, C_PAD), lambda b: (b, 0, 0, 0)),
        compiler_params=pltpu.CompilerParams(dimension_semantics=("parallel",)),
    )(x, slab)
    out = out[..., :C]
    return jnp.transpose(out, (0, 3, 1, 2))


# ---- pure-JAX reference matching the PyTorch forward (eval-mode BN) ------------
def residual_ref(x_nchw, p):
    def dwconv(inp, w, b):
        out = lax.conv_general_dilated(
            inp, w, window_strides=(1, 1), padding=((1, 1), (1, 1)),
            dimension_numbers=("NCHW", "OIHW", "NCHW"),
            feature_group_count=C)
        return out + b[None, :, None, None]

    def bn(inp, g, bta, m, v):
        return (inp - m[None, :, None, None]) * (
            g[None, :, None, None] / jnp.sqrt(v[None, :, None, None] + EPS)
        ) + bta[None, :, None, None]

    y = jax.nn.relu(bn(dwconv(x_nchw, p["conv1_w"], p["conv1_b"]),
                       p["bn1_gamma"], p["bn1_beta"], p["bn1_mean"], p["bn1_var"]))
    y = bn(dwconv(y, p["conv2_w"], p["conv2_b"]),
           p["bn2_gamma"], p["bn2_beta"], p["bn2_mean"], p["bn2_var"])
    return jax.nn.relu(x_nchw + y)


def init_params(key):
    ks = jax.random.split(key, 12)
    sc = 0.2
    return {
        # depthwise conv weights in PyTorch layout (C_out, C_in/groups=1, 3, 3)
        "conv1_w": jax.random.normal(ks[0], (C, 1, KH, KW), jnp.float32) * sc,
        "conv1_b": jax.random.normal(ks[1], (C,), jnp.float32) * sc,
        "conv2_w": jax.random.normal(ks[2], (C, 1, KH, KW), jnp.float32) * sc,
        "conv2_b": jax.random.normal(ks[3], (C,), jnp.float32) * sc,
        "bn1_gamma": 1.0 + 0.1 * jax.random.normal(ks[4], (C,), jnp.float32),
        "bn1_beta": 0.1 * jax.random.normal(ks[5], (C,), jnp.float32),
        "bn1_mean": 0.1 * jax.random.normal(ks[6], (C,), jnp.float32),
        "bn1_var": 0.5 + 0.5 * jnp.abs(jax.random.normal(ks[7], (C,), jnp.float32)),
        "bn2_gamma": 1.0 + 0.1 * jax.random.normal(ks[8], (C,), jnp.float32),
        "bn2_beta": 0.1 * jax.random.normal(ks[9], (C,), jnp.float32),
        "bn2_mean": 0.1 * jax.random.normal(ks[10], (C,), jnp.float32),
        "bn2_var": 0.5 + 0.5 * jnp.abs(jax.random.normal(ks[11], (C,), jnp.float32)),
    }


if __name__ == "__main__":
    key = jax.random.PRNGKey(0)
    pkey, xkey = jax.random.split(key)
    params = init_params(pkey)
    x = jax.random.normal(xkey, (B, C, H, W), jnp.float32)

    out = jax.block_until_ready(residual_forward(x, params))
    ref = residual_ref(x, params)
    assert out.shape == (B, C, H, W)
    np.testing.assert_allclose(np.asarray(out), np.asarray(ref), rtol=2e-3, atol=2e-3)
    print("KERNEL_OK")
</pallas_src>

<mosaic_0001>
module attributes {stable_mosaic.version = 11 : i64} {
  func.func @residual_kernel(%arg0: i32, %arg1: memref<1x8x8x256xf32, #tpu.memory_space<vmem>>, %arg2: memref<32x256xf32, #tpu.memory_space<vmem>>, %arg3: memref<1x8x8x256xf32, #tpu.memory_space<vmem>>) attributes {dimension_semantics = [#tpu.dimension_semantics<parallel>], iteration_bounds = array<i64: 2>, scalar_prefetch = 0 : i64, scratch_operands = 0 : i64, tpu.core_type = #tpu.core_type<tc>, window_params = [{transform_indices = @transform_0, window_bounds = array<i64: 1, 8, 8, 256>}, {pipeline_mode = #tpu.pipeline_mode<synchronous>, transform_indices = @transform_1, window_bounds = array<i64: 32, 256>}, {transform_indices = @transform_2, window_bounds = array<i64: 1, 8, 8, 256>}]} {
    %c0 = arith.constant 0 : index
    %c0_0 = arith.constant 0 : index
    %c0_1 = arith.constant 0 : index
    %c0_2 = arith.constant 0 : index
    %0 = vector.load %arg1[%c0, %c0_0, %c0_1, %c0_2] : memref<1x8x8x256xf32, #tpu.memory_space<vmem>>, vector<1x8x8x256xf32>
    %1 = vector.shape_cast %0 : vector<1x8x8x256xf32> to vector<8x8x256xf32>
    %cst = arith.constant 0.000000e+00 : f32
    %2 = vector.broadcast %cst : f32 to vector<1x8x256xf32>
    %3 = tpu.concatenate %2, %1, %2 in 0 : vector<1x8x256xf32>, vector<8x8x256xf32>, vector<1x8x256xf32> -> vector<10x8x256xf32>
    %cst_3 = arith.constant 0.000000e+00 : f32
    %4 = vector.broadcast %cst_3 : f32 to vector<10x1x256xf32>
    %5 = tpu.concatenate %4, %3, %4 in 1 : vector<10x1x256xf32>, vector<10x8x256xf32>, vector<10x1x256xf32> -> vector<10x10x256xf32>
    %cst_4 = arith.constant 0.000000e+00 : f32
    %6 = vector.broadcast %cst_4 : f32 to vector<8x8x256xf32>
    %c9 = arith.constant 9 : index
    %c0_5 = arith.constant 0 : index
    %7 = vector.load %arg2[%c9, %c0_5] : memref<32x256xf32, #tpu.memory_space<vmem>>, vector<1x256xf32>
    %8 = vector.shape_cast %7 : vector<1x256xf32> to vector<1x1x256xf32>
    %9 = vector.broadcast %8 : vector<1x1x256xf32> to vector<8x8x256xf32>
    %10 = arith.addf %6, %9 : vector<8x8x256xf32>
    %11 = vector.extract_strided_slice %5 {offsets = [0, 0, 0], sizes = [8, 8, 256], strides = [1, 1, 1]} : vector<10x10x256xf32> to vector<8x8x256xf32>
    %c0_6 = arith.constant 0 : index
    %c0_7 = arith.constant 0 : index
    %12 = vector.load %arg2[%c0_6, %c0_7] : memref<32x256xf32, #tpu.memory_space<vmem>>, vector<1x256xf32>
    %13 = vector.shape_cast %12 : vector<1x256xf32> to vector<1x1x256xf32>
    %14 = vector.broadcast %13 : vector<1x1x256xf32> to vector<8x8x256xf32>
    %15 = arith.mulf %11, %14 : vector<8x8x256xf32>
    %16 = arith.addf %10, %15 : vector<8x8x256xf32>
    %17 = vector.extract_strided_slice %5 {offsets = [0, 1, 0], sizes = [8, 8, 256], strides = [1, 1, 1]} : vector<10x10x256xf32> to vector<8x8x256xf32>
    %c1 = arith.constant 1 : index
    %c0_8 = arith.constant 0 : index
    %18 = vector.load %arg2[%c1, %c0_8] : memref<32x256xf32, #tpu.memory_space<vmem>>, vector<1x256xf32>
    %19 = vector.shape_cast %18 : vector<1x256xf32> to vector<1x1x256xf32>
    %20 = vector.broadcast %19 : vector<1x1x256xf32> to vector<8x8x256xf32>
    %21 = arith.mulf %17, %20 : vector<8x8x256xf32>
    %22 = arith.addf %16, %21 : vector<8x8x256xf32>
    %23 = vector.extract_strided_slice %5 {offsets = [0, 2, 0], sizes = [8, 8, 256], strides = [1, 1, 1]} : vector<10x10x256xf32> to vector<8x8x256xf32>
    %c2 = arith.constant 2 : index
    %c0_9 = arith.constant 0 : index
    %24 = vector.load %arg2[%c2, %c0_9] : memref<32x256xf32, #tpu.memory_space<vmem>>, vector<1x256xf32>
    %25 = vector.shape_cast %24 : vector<1x256xf32> to vector<1x1x256xf32>
    %26 = vector.broadcast %25 : vector<1x1x256xf32> to vector<8x8x256xf32>
    %27 = arith.mulf %23, %26 : vector<8x8x256xf32>
    %28 = arith.addf %22, %27 : vector<8x8x256xf32>
    %29 = vector.extract_strided_slice %5 {offsets = [1, 0, 0], sizes = [8, 8, 256], strides = [1, 1, 1]} : vector<10x10x256xf32> to vector<8x8x256xf32>
    %c3 = arith.constant 3 : index
    %c0_10 = arith.constant 0 : index
    %30 = vector.load %arg2[%c3, %c0_10] : memref<32x256xf32, #tpu.memory_space<vmem>>, vector<1x256xf32>
    %31 = vector.shape_cast %30 : vector<1x256xf32> to vector<1x1x256xf32>
    %32 = vector.broadcast %31 : vector<1x1x256xf32> to vector<8x8x256xf32>
    %33 = arith.mulf %29, %32 : vector<8x8x256xf32>
    %34 = arith.addf %28, %33 : vector<8x8x256xf32>
    %35 = vector.extract_strided_slice %5 {offsets = [1, 1, 0], sizes = [8, 8, 256], strides = [1, 1, 1]} : vector<10x10x256xf32> to vector<8x8x256xf32>
    %c4 = arith.constant 4 : index
    %c0_11 = arith.constant 0 : index
    %36 = vector.load %arg2[%c4, %c0_11] : memref<32x256xf32, #tpu.memory_space<vmem>>, vector<1x256xf32>
    %37 = vector.shape_cast %36 : vector<1x256xf32> to vector<1x1x256xf32>
    %38 = vector.broadcast %37 : vector<1x1x256xf32> to vector<8x8x256xf32>
    %39 = arith.mulf %35, %38 : vector<8x8x256xf32>
    %40 = arith.addf %34, %39 : vector<8x8x256xf32>
    %41 = vector.extract_strided_slice %5 {offsets = [1, 2, 0], sizes = [8, 8, 256], strides = [1, 1, 1]} : vector<10x10x256xf32> to vector<8x8x256xf32>
    %c5 = arith.constant 5 : index
    %c0_12 = arith.constant 0 : index
    %42 = vector.load %arg2[%c5, %c0_12] : memref<32x256xf32, #tpu.memory_space<vmem>>, vector<1x256xf32>
    %43 = vector.shape_cast %42 : vector<1x256xf32> to vector<1x1x256xf32>
    %44 = vector.broadcast %43 : vector<1x1x256xf32> to vector<8x8x256xf32>
    %45 = arith.mulf %41, %44 : vector<8x8x256xf32>
    %46 = arith.addf %40, %45 : vector<8x8x256xf32>
    %47 = vector.extract_strided_slice %5 {offsets = [2, 0, 0], sizes = [8, 8, 256], strides = [1, 1, 1]} : vector<10x10x256xf32> to vector<8x8x256xf32>
    %c6 = arith.constant 6 : index
    %c0_13 = arith.constant 0 : index
    %48 = vector.load %arg2[%c6, %c0_13] : memref<32x256xf32, #tpu.memory_space<vmem>>, vector<1x256xf32>
    %49 = vector.shape_cast %48 : vector<1x256xf32> to vector<1x1x256xf32>
    %50 = vector.broadcast %49 : vector<1x1x256xf32> to vector<8x8x256xf32>
    %51 = arith.mulf %47, %50 : vector<8x8x256xf32>
    %52 = arith.addf %46, %51 : vector<8x8x256xf32>
    %53 = vector.extract_strided_slice %5 {offsets = [2, 1, 0], sizes = [8, 8, 256], strides = [1, 1, 1]} : vector<10x10x256xf32> to vector<8x8x256xf32>
    %c7 = arith.constant 7 : index
    %c0_14 = arith.constant 0 : index
    %54 = vector.load %arg2[%c7, %c0_14] : memref<32x256xf32, #tpu.memory_space<vmem>>, vector<1x256xf32>
    %55 = vector.shape_cast %54 : vector<1x256xf32> to vector<1x1x256xf32>
    %56 = vector.broadcast %55 : vector<1x1x256xf32> to vector<8x8x256xf32>
    %57 = arith.mulf %53, %56 : vector<8x8x256xf32>
    %58 = arith.addf %52, %57 : vector<8x8x256xf32>
    %59 = vector.extract_strided_slice %5 {offsets = [2, 2, 0], sizes = [8, 8, 256], strides = [1, 1, 1]} : vector<10x10x256xf32> to vector<8x8x256xf32>
    %c8 = arith.constant 8 : index
    %c0_15 = arith.constant 0 : index
    %60 = vector.load %arg2[%c8, %c0_15] : memref<32x256xf32, #tpu.memory_space<vmem>>, vector<1x256xf32>
    %61 = vector.shape_cast %60 : vector<1x256xf32> to vector<1x1x256xf32>
    %62 = vector.broadcast %61 : vector<1x1x256xf32> to vector<8x8x256xf32>
    %63 = arith.mulf %59, %62 : vector<8x8x256xf32>
    %64 = arith.addf %58, %63 : vector<8x8x256xf32>
    %c20 = arith.constant 20 : index
    %c0_16 = arith.constant 0 : index
    %65 = vector.load %arg2[%c20, %c0_16] : memref<32x256xf32, #tpu.memory_space<vmem>>, vector<1x256xf32>
    %c21 = arith.constant 21 : index
    %c0_17 = arith.constant 0 : index
    %66 = vector.load %arg2[%c21, %c0_17] : memref<32x256xf32, #tpu.memory_space<vmem>>, vector<1x256xf32>
    %c22 = arith.constant 22 : index
    %c0_18 = arith.constant 0 : index
    %67 = vector.load %arg2[%c22, %c0_18] : memref<32x256xf32, #tpu.memory_space<vmem>>, vector<1x256xf32>
    %c23 = arith.constant 23 : index
    %c0_19 = arith.constant 0 : index
    %68 = vector.load %arg2[%c23, %c0_19] : memref<32x256xf32, #tpu.memory_space<vmem>>, vector<1x256xf32>
    %cst_20 = arith.constant 9.99999974E-6 : f32
    %69 = vector.broadcast %cst_20 : f32 to vector<1x256xf32>
    %70 = arith.addf %68, %69 : vector<1x256xf32>
    %71 = math.rsqrt %70 : vector<1x256xf32>
    %72 = arith.mulf %65, %71 : vector<1x256xf32>
    %73 = vector.shape_cast %67 : vector<1x256xf32> to vector<1x1x256xf32>
    %74 = vector.broadcast %73 : vector<1x1x256xf32> to vector<8x8x256xf32>
    %75 = arith.subf %64, %74 : vector<8x8x256xf32>
    %76 = vector.shape_cast %72 : vector<1x256xf32> to vector<1x1x256xf32>
    %77 = vector.broadcast %76 : vector<1x1x256xf32> to vector<8x8x256xf32>
    %78 = arith.mulf %75, %77 : vector<8x8x256xf32>
    %79 = vector.shape_cast %66 : vector<1x256xf32> to vector<1x1x256xf32>
    %80 = vector.broadcast %79 : vector<1x1x256xf32> to vector<8x8x256xf32>
    %81 = arith.addf %78, %80 : vector<8x8x256xf32>
    %cst_21 = arith.constant 0.000000e+00 : f32
    %82 = vector.broadcast %cst_21 : f32 to vector<8x8x256xf32>
    %83 = arith.maximumf %81, %82 : vector<8x8x256xf32>
    %cst_22 = arith.constant 0.000000e+00 : f32
    %84 = vector.broadcast %cst_22 : f32 to vector<1x8x256xf32>
    %85 = tpu.concatenate %84, %83, %84 in 0 : vector<1x8x256xf32>, vector<8x8x256xf32>, vector<1x8x256xf32> -> vector<10x8x256xf32>
    %cst_23 = arith.constant 0.000000e+00 : f32
    %86 = vector.broadcast %cst_23 : f32 to vector<10x1x256xf32>
    %87 = tpu.concatenate %86, %85, %86 in 1 : vector<10x1x256xf32>, vector<10x8x256xf32>, vector<10x1x256xf32> -> vector<10x10x256xf32>
    %cst_24 = arith.constant 0.000000e+00 : f32
    %88 = vector.broadcast %cst_24 : f32 to vector<8x8x256xf32>
    %c19 = arith.constant 19 : index
    %c0_25 = arith.constant 0 : index
    %89 = vector.load %arg2[%c19, %c0_25] : memref<32x256xf32, #tpu.memory_space<vmem>>, vector<1x256xf32>
    %90 = vector.shape_cast %89 : vector<1x256xf32> to vector<1x1x256xf32>
    %91 = vector.broadcast %90 : vector<1x1x256xf32> to vector<8x8x256xf32>
    %92 = arith.addf %88, %91 : vector<8x8x256xf32>
    %93 = vector.extract_strided_slice %87 {offsets = [0, 0, 0], sizes = [8, 8, 256], strides = [1, 1, 1]} : vector<10x10x256xf32> to vector<8x8x256xf32>
    %c10 = arith.constant 10 : index
    %c0_26 = arith.constant 0 : index
    %94 = vector.load %arg2[%c10, %c0_26] : memref<32x256xf32, #tpu.memory_space<vmem>>, vector<1x256xf32>
    %95 = vector.shape_cast %94 : vector<1x256xf32> to vector<1x1x256xf32>
    %96 = vector.broadcast %95 : vector<1x1x256xf32> to vector<8x8x256xf32>
    %97 = arith.mulf %93, %96 : vector<8x8x256xf32>
    %98 = arith.addf %92, %97 : vector<8x8x256xf32>
    %99 = vector.extract_strided_slice %87 {offsets = [0, 1, 0], sizes = [8, 8, 256], strides = [1, 1, 1]} : vector<10x10x256xf32> to vector<8x8x256xf32>
    %c11 = arith.constant 11 : index
    %c0_27 = arith.constant 0 : index
    %100 = vector.load %arg2[%c11, %c0_27] : memref<32x256xf32, #tpu.memory_space<vmem>>, vector<1x256xf32>
    %101 = vector.shape_cast %100 : vector<1x256xf32> to vector<1x1x256xf32>
    %102 = vector.broadcast %101 : vector<1x1x256xf32> to vector<8x8x256xf32>
    %103 = arith.mulf %99, %102 : vector<8x8x256xf32>
    %104 = arith.addf %98, %103 : vector<8x8x256xf32>
    %105 = vector.extract_strided_slice %87 {offsets = [0, 2, 0], sizes = [8, 8, 256], strides = [1, 1, 1]} : vector<10x10x256xf32> to vector<8x8x256xf32>
    %c12 = arith.constant 12 : index
    %c0_28 = arith.constant 0 : index
    %106 = vector.load %arg2[%c12, %c0_28] : memref<32x256xf32, #tpu.memory_space<vmem>>, vector<1x256xf32>
    %107 = vector.shape_cast %106 : vector<1x256xf32> to vector<1x1x256xf32>
    %108 = vector.broadcast %107 : vector<1x1x256xf32> to vector<8x8x256xf32>
    %109 = arith.mulf %105, %108 : vector<8x8x256xf32>
    %110 = arith.addf %104, %109 : vector<8x8x256xf32>
    %111 = vector.extract_strided_slice %87 {offsets = [1, 0, 0], sizes = [8, 8, 256], strides = [1, 1, 1]} : vector<10x10x256xf32> to vector<8x8x256xf32>
    %c13 = arith.constant 13 : index
    %c0_29 = arith.constant 0 : index
    %112 = vector.load %arg2[%c13, %c0_29] : memref<32x256xf32, #tpu.memory_space<vmem>>, vector<1x256xf32>
    %113 = vector.shape_cast %112 : vector<1x256xf32> to vector<1x1x256xf32>
    %114 = vector.broadcast %113 : vector<1x1x256xf32> to vector<8x8x256xf32>
    %115 = arith.mulf %111, %114 : vector<8x8x256xf32>
    %116 = arith.addf %110, %115 : vector<8x8x256xf32>
    %117 = vector.extract_strided_slice %87 {offsets = [1, 1, 0], sizes = [8, 8, 256], strides = [1, 1, 1]} : vector<10x10x256xf32> to vector<8x8x256xf32>
    %c14 = arith.constant 14 : index
    %c0_30 = arith.constant 0 : index
    %118 = vector.load %arg2[%c14, %c0_30] : memref<32x256xf32, #tpu.memory_space<vmem>>, vector<1x256xf32>
    %119 = vector.shape_cast %118 : vector<1x256xf32> to vector<1x1x256xf32>
    %120 = vector.broadcast %119 : vector<1x1x256xf32> to vector<8x8x256xf32>
    %121 = arith.mulf %117, %120 : vector<8x8x256xf32>
    %122 = arith.addf %116, %121 : vector<8x8x256xf32>
    %123 = vector.extract_strided_slice %87 {offsets = [1, 2, 0], sizes = [8, 8, 256], strides = [1, 1, 1]} : vector<10x10x256xf32> to vector<8x8x256xf32>
    %c15 = arith.constant 15 : index
    %c0_31 = arith.constant 0 : index
    %124 = vector.load %arg2[%c15, %c0_31] : memref<32x256xf32, #tpu.memory_space<vmem>>, vector<1x256xf32>
    %125 = vector.shape_cast %124 : vector<1x256xf32> to vector<1x1x256xf32>
    %126 = vector.broadcast %125 : vector<1x1x256xf32> to vector<8x8x256xf32>
    %127 = arith.mulf %123, %126 : vector<8x8x256xf32>
    %128 = arith.addf %122, %127 : vector<8x8x256xf32>
    %129 = vector.extract_strided_slice %87 {offsets = [2, 0, 0], sizes = [8, 8, 256], strides = [1, 1, 1]} : vector<10x10x256xf32> to vector<8x8x256xf32>
    %c16 = arith.constant 16 : index
    %c0_32 = arith.constant 0 : index
    %130 = vector.load %arg2[%c16, %c0_32] : memref<32x256xf32, #tpu.memory_space<vmem>>, vector<1x256xf32>
    %131 = vector.shape_cast %130 : vector<1x256xf32> to vector<1x1x256xf32>
    %132 = vector.broadcast %131 : vector<1x1x256xf32> to vector<8x8x256xf32>
    %133 = arith.mulf %129, %132 : vector<8x8x256xf32>
    %134 = arith.addf %128, %133 : vector<8x8x256xf32>
    %135 = vector.extract_strided_slice %87 {offsets = [2, 1, 0], sizes = [8, 8, 256], strides = [1, 1, 1]} : vector<10x10x256xf32> to vector<8x8x256xf32>
    %c17 = arith.constant 17 : index
    %c0_33 = arith.constant 0 : index
    %136 = vector.load %arg2[%c17, %c0_33] : memref<32x256xf32, #tpu.memory_space<vmem>>, vector<1x256xf32>
    %137 = vector.shape_cast %136 : vector<1x256xf32> to vector<1x1x256xf32>
    %138 = vector.broadcast %137 : vector<1x1x256xf32> to vector<8x8x256xf32>
    %139 = arith.mulf %135, %138 : vector<8x8x256xf32>
    %140 = arith.addf %134, %139 : vector<8x8x256xf32>
    %141 = vector.extract_strided_slice %87 {offsets = [2, 2, 0], sizes = [8, 8, 256], strides = [1, 1, 1]} : vector<10x10x256xf32> to vector<8x8x256xf32>
    %c18 = arith.constant 18 : index
    %c0_34 = arith.constant 0 : index
    %142 = vector.load %arg2[%c18, %c0_34] : memref<32x256xf32, #tpu.memory_space<vmem>>, vector<1x256xf32>
    %143 = vector.shape_cast %142 : vector<1x256xf32> to vector<1x1x256xf32>
    %144 = vector.broadcast %143 : vector<1x1x256xf32> to vector<8x8x256xf32>
    %145 = arith.mulf %141, %144 : vector<8x8x256xf32>
    %146 = arith.addf %140, %145 : vector<8x8x256xf32>
    %c24 = arith.constant 24 : index
    %c0_35 = arith.constant 0 : index
    %147 = vector.load %arg2[%c24, %c0_35] : memref<32x256xf32, #tpu.memory_space<vmem>>, vector<1x256xf32>
    %c25 = arith.constant 25 : index
    %c0_36 = arith.constant 0 : index
    %148 = vector.load %arg2[%c25, %c0_36] : memref<32x256xf32, #tpu.memory_space<vmem>>, vector<1x256xf32>
    %c26 = arith.constant 26 : index
    %c0_37 = arith.constant 0 : index
    %149 = vector.load %arg2[%c26, %c0_37] : memref<32x256xf32, #tpu.memory_space<vmem>>, vector<1x256xf32>
    %c27 = arith.constant 27 : index
    %c0_38 = arith.constant 0 : index
    %150 = vector.load %arg2[%c27, %c0_38] : memref<32x256xf32, #tpu.memory_space<vmem>>, vector<1x256xf32>
    %cst_39 = arith.constant 9.99999974E-6 : f32
    %151 = vector.broadcast %cst_39 : f32 to vector<1x256xf32>
    %152 = arith.addf %150, %151 : vector<1x256xf32>
    %153 = math.rsqrt %152 : vector<1x256xf32>
    %154 = arith.mulf %147, %153 : vector<1x256xf32>
    %155 = vector.shape_cast %149 : vector<1x256xf32> to vector<1x1x256xf32>
    %156 = vector.broadcast %155 : vector<1x1x256xf32> to vector<8x8x256xf32>
    %157 = arith.subf %146, %156 : vector<8x8x256xf32>
    %158 = vector.shape_cast %154 : vector<1x256xf32> to vector<1x1x256xf32>
    %159 = vector.broadcast %158 : vector<1x1x256xf32> to vector<8x8x256xf32>
    %160 = arith.mulf %157, %159 : vector<8x8x256xf32>
    %161 = vector.shape_cast %148 : vector<1x256xf32> to vector<1x1x256xf32>
    %162 = vector.broadcast %161 : vector<1x1x256xf32> to vector<8x8x256xf32>
    %163 = arith.addf %160, %162 : vector<8x8x256xf32>
    %164 = arith.addf %1, %163 : vector<8x8x256xf32>
    %cst_40 = arith.constant 0.000000e+00 : f32
    %165 = vector.broadcast %cst_40 : f32 to vector<8x8x256xf32>
    %166 = arith.maximumf %164, %165 : vector<8x8x256xf32>
    %c0_41 = arith.constant 0 : index
    %c0_42 = arith.constant 0 : index
    %c0_43 = arith.constant 0 : index
    %c0_44 = arith.constant 0 : index
    %167 = vector.load %arg3[%c0_41, %c0_42, %c0_43, %c0_44] : memref<1x8x8x256xf32, #tpu.memory_space<vmem>>, vector<1x8x8x256xf32>
    %168 = vector.shape_cast %167 : vector<1x8x8x256xf32> to vector<8x8x256xf32>
    %169 = vector.shape_cast %166 : vector<8x8x256xf32> to vector<1x8x8x256xf32>
    tpu.vector_store %arg3[%c0_41, %c0_42, %c0_43, %c0_44], %169 {strides = array<i32>} : memref<1x8x8x256xf32, #tpu.memory_space<vmem>>, vector<1x8x8x256xf32>,
    return
  }
  func.func @transform_0(%arg0: i32) -> (i32, i32, i32, i32) {
    %c0_i32 = arith.constant 0 : i32
    %c0_i32_0 = arith.constant 0 : i32
    %c0_i32_1 = arith.constant 0 : i32
    %c0_i32_2 = arith.constant 0 : i32
    return %arg0, %c0_i32, %c0_i32_0, %c0_i32_1 : i32, i32, i32, i32
  }
  func.func @transform_1(%arg0: i32) -> (i32, i32) {
    %c0_i32 = arith.constant 0 : i32
    %c0_i32_0 = arith.constant 0 : i32
    %c0_i32_1 = arith.constant 0 : i32
    return %c0_i32, %c0_i32_0 : i32, i32
  }
  func.func @transform_2(%arg0: i32) -> (i32, i32, i32, i32) {
    %c0_i32 = arith.constant 0 : i32
    %c0_i32_0 = arith.constant 0 : i32
    %c0_i32_1 = arith.constant 0 : i32
    %c0_i32_2 = arith.constant 0 : i32
    return %arg0, %c0_i32, %c0_i32_0, %c0_i32_1 : i32, i32, i32, i32
  }
}

</mosaic_0001>

<llo_original>
// kernel: tpu_custom_call.1
$region0: #{tpu_custom_call.1}
  #allocation0 [shape = 'u32[]', space=smem, size = 0x4, offset = 0x4, fixed_abs, tag = 'smem constant byte address 0x4 - core index']
  #allocation1 [shape = 'u32[144,128]{1,0:T(1,128)}', space=vmem, size = 0x12000, scoped, tag = 'internal scratch']
  %s0 = inlined_call_operand.hbm [shape: f32[2,8,8,256], index: 0, kind: input, shape index: {}]
  %s1 = inlined_call_operand.hbm [shape: f32[32,256], index: 1, kind: input, shape index: {}]
  %s2 = inlined_call_operand.hbm [shape: f32[2,8,8,256], index: 2, kind: output, shape index: {}]
  %s3 = sld [smem:[#allocation0]]
  $region49: #{tpu_custom_call.1} parent=0
    _
  %s5 = ssub.s32 1, %s3
  %s6 = scalar_select 0, %s5, %s3
  $region1: #{tpu_custom_call.1} parent=0
    #allocation2 [shape = 'u8[131072]{0}', space=vmem, size = 0x20000, scoped, tag = 'input window, operand 0']
    #allocation3 [shape = 's32[2]{0}', space=sflag, size = 0x8, scoped, tag = 'scoped memory for tpu_custom_call.1']
    #allocation4 [shape = 's32[2]{0}', space=sflag, size = 0x8, scoped, tag = 'scoped memory for tpu_custom_call.1']
    #allocation5 [shape = 'u8[32768]{0}', space=vmem, size = 0x8000, scoped, tag = 'input window, operand 1, single buffered']
    #allocation6 [shape = 's32[1]{0}', space=sflag, size = 0x4, scoped, tag = 'scoped memory for tpu_custom_call.1']
    #allocation7 [shape = 'u8[131072]{0}', space=vmem, size = 0x20000, scoped, tag = 'output window, operand 0']
    %7 = vsyncpa [#allocation3], 0
    %s8 = scalar_lea.sflag [#allocation3], 1
    %9 = vsyncpa %s8, 0
    %10 = vsyncpa [#allocation6], 0
    %11 = vsyncpa [#allocation4], 0
    %s12 = scalar_lea.sflag [#allocation4], 1
    %13 = vsyncpa %s12, 0
    loop: start=0, step=1, limit=4
    $region2: #{tpu_custom_call.1} parent=1 // loop_pre_header
      _
    $region3: #{tpu_custom_call.1} parent=1 // loop_header
      %s15 = sphi 0, %s19
      %p16 = scmp.ge.s32.totalorder %s15, 4
      %s25 = sphi 0, %s27
      %s28 = sphi 0, %s25
      %s29 = sphi 0, %s28
      %s45 = sphi 0, %s29
      %s49 = sphi 0, %s49
      %s51 = sphi 0, %s49
      %s52 = sphi 0, %s51
      %s66 = sphi 0, %s52
      %s72 = sphi 0, %s74
      %s75 = sphi 0, %s72
      %s76 = sphi 0, %s75
      %s92 = sphi 0, %s76
    $region4: #{tpu_custom_call.1} parent=1 // loop_header_branch
      %18 = sbr.rel (%p16) target = $region8
    $region5: #{tpu_custom_call.1} parent=1 // loop_body
      %s20 = ssub.s32 %s15, 1
      %s21 = ssub.s32 %s15, 2
      %s22 = sadd.s32 %s15, 1
      %s23 = ssub.s32 %s15, %s22
      %p24 = scmp.eq.s32.totalorder %s23, 0
      %s26 = sadd.s32 %s25, 1
      %s27 = scalar_select %p24, %s25, %s26
      %p30 = pneg %p24
      %p31 = scmp.eq.s32.totalorder %s15, 1
      %p32 = por %p30, %p31
      %p33 = scmp.ne.s32.totalorder %s25, %s28
      %p34 = scmp.eq.s32.totalorder %s15, 0
      %p35 = por %p33, %p34
      %p36 = scmp.ne.s32.totalorder %s25, %s28
      %p37 = scmp.eq.s32.totalorder %s20, 1
      %p38 = por %p36, %p37
      %p39 = scmp.ne.s32.totalorder %s28, %s29
      %p40 = scmp.eq.s32.totalorder %s20, 0
      %p41 = por %p39, %p40
      %p42 = scmp.ne.s32.totalorder %s28, %s29
      %p43 = scmp.eq.s32.totalorder %s21, 1
      %p44 = por %p42, %p43
      %p46 = scmp.ne.s32.totalorder %s29, %s45
      %p47 = scmp.eq.s32.totalorder %s21, 0
      %p48 = por %p46, %p47
      %s50 = sadd.s32 %s49, 1
      %p53 = scmp.eq.s32.totalorder %s15, 1
      %p54 = scmp.ne.s32.totalorder %s49, %s51
      %p55 = scmp.eq.s32.totalorder %s15, 0
      %p56 = por %p54, %p55
      %p57 = scmp.ne.s32.totalorder %s49, %s51
      %p58 = scmp.eq.s32.totalorder %s20, 1
      %p59 = por %p57, %p58
      %p60 = scmp.ne.s32.totalorder %s51, %s52
      %p61 = scmp.eq.s32.totalorder %s20, 0
      %p62 = por %p60, %p61
      %p63 = scmp.ne.s32.totalorder %s51, %s52
      %p64 = scmp.eq.s32.totalorder %s21, 1
      %p65 = por %p63, %p64
      %p67 = scmp.ne.s32.totalorder %s52, %s66
      %p68 = scmp.eq.s32.totalorder %s21, 0
      %p69 = por %p67, %p68
      %s70 = ssub.s32 %s15, %s22
      %p71 = scmp.eq.s32.totalorder %s70, 0
      %s73 = sadd.s32 %s72, 1
      %s74 = scalar_select %p71, %s72, %s73
      %p77 = pneg %p71
      %p78 = scmp.eq.s32.totalorder %s15, 1
      %p79 = por %p77, %p78
      %p80 = scmp.ne.s32.totalorder %s72, %s75
      %p81 = scmp.eq.s32.totalorder %s15, 0
      %p82 = por %p80, %p81
      %p83 = scmp.ne.s32.totalorder %s72, %s75
      %p84 = scmp.eq.s32.totalorder %s20, 1
      %p85 = por %p83, %p84
      %p86 = scmp.ne.s32.totalorder %s75, %s76
      %p87 = scmp.eq.s32.totalorder %s20, 0
      %p88 = por %p86, %p87
      %p89 = scmp.ne.s32.totalorder %s75, %s76
      %p90 = scmp.eq.s32.totalorder %s21, 1
      %p91 = por %p89, %p90
      %p93 = scmp.ne.s32.totalorder %s76, %s92
      %p94 = scmp.eq.s32.totalorder %s21, 0
      %p95 = por %p93, %p94
      %p96 = scmp.le.s32.totalorder 1, %s15
      %p97 = scmp.lt.s32.totalorder %s15, 3
      %p98 = pnand %p96, %p97
      %p99 = pneg %p98
      // Predicated region
      $region9: #{tpu_custom_call.1} parent=5 // pred_check
        _
      $region10: #{tpu_custom_call.1} parent=5 // pred_check_branch
        %101 = sbr.rel (%p98) target = $region12
      $region11: #{tpu_custom_call.1} parent=5 // pred_region
        %s102 = ssub.s32 %s15, 1
        // Predicated region
        $region13: #{tpu_custom_call.1} parent=11 // pred_check
          %p103 = pneg %p62
        $region14: #{tpu_custom_call.1} parent=11 // pred_check_branch
          %105 = sbr.rel (%p103) target = $region16
        $region15: #{tpu_custom_call.1} parent=11 // pred_region
          %s107 = ssub.s32 1024, 1024
          %108 = vsyncadd [#allocation6], %s107
          %s109 = sshll.u32 [#allocation5], 4
          %s110 = int_to_ptr.vmem [resolvable:$true] %s109
          %115 = dma.hbm_to_vmem [thread:$0]  %s1, 1024, %s110, [#allocation6], 256, 256, 16
        $region16: #{tpu_custom_call.1} parent=11 // pred_fallthru
          _
      $region12: #{tpu_custom_call.1} parent=5 // pred_fallthru
        _
      %p116 = scmp.lt.s32.totalorder %s15, 2
      // Predicated region
      $region17: #{tpu_custom_call.1} parent=5 // pred_check
        %p117 = pneg %p116
      $region18: #{tpu_custom_call.1} parent=5 // pred_check_branch
        %119 = sbr.rel (%p117) target = $region20
      $region19: #{tpu_custom_call.1} parent=5 // pred_region
        // Predicated region
        $region21: #{tpu_custom_call.1} parent=19 // pred_check
          %p120 = pneg %p35
        $region22: #{tpu_custom_call.1} parent=19 // pred_check_branch
          %122 = sbr.rel (%p120) target = $region24
        $region23: #{tpu_custom_call.1} parent=19 // pred_region
          %s123 = sand.u32 %s25, 1
          %s124 = scalar_lea.sflag [#allocation3], %s123
          %s125 = sand.u32 %s25, 1
          %s126 = smul.addr %s125, 128
          %s127 = scalar_lea.vmem [#allocation2], %s126
          %s129 = ssub.s32 2048, 2048
          %130 = vsyncadd %s124, %s129
          %s131 = smul.addr %s15, 16
          %s132 = smul.addr %s131, 128
          %s133 = scalar_lea.hbm %s0, %s132
          %s134 = sshll.u32 %s127, 4
          %s135 = int_to_ptr.vmem [resolvable:$true] %s134
          %140 = dma.hbm_to_vmem [thread:$0]  %s133, 2048, %s135, %s124, 256, 256, 16
        $region24: #{tpu_custom_call.1} parent=19 // pred_fallthru
          _
      $region20: #{tpu_custom_call.1} parent=5 // pred_fallthru
        _
      %p141 = scmp.le.s32.totalorder 1, %s15
      %p142 = scmp.lt.s32.totalorder %s15, 3
      %p143 = pnand %p141, %p142
      %p144 = pneg %p143
      // Predicated region
      $region25: #{tpu_custom_call.1} parent=5 // pred_check
        _
      $region26: #{tpu_custom_call.1} parent=5 // pred_check_branch
        %146 = sbr.rel (%p143) target = $region28
      $region27: #{tpu_custom_call.1} parent=5 // pred_region
        %s147 = ssub.s32 %s15, 1
        %s148 = sand.u32 %s28, 1
        %s149 = scalar_lea.sflag [#allocation3], %s148
        %s150 = sand.u32 %s28, 1
        %s151 = smul.addr %s150, 128
        %s152 = scalar_lea.vmem [#allocation2], %s151
        // Predicated region
        $region29: #{tpu_custom_call.1} parent=27 // pred_check
          %p153 = pneg %p41
        $region30: #{tpu_custom_call.1} parent=27 // pred_check_branch
          %155 = sbr.rel (%p153) target = $region32
        $region31: #{tpu_custom_call.1} parent=27 // pred_region
          %156 = dma.done %s149, 2048
        $region32: #{tpu_custom_call.1} parent=27 // pred_fallthru
          _
        // Predicated region
        $region33: #{tpu_custom_call.1} parent=27 // pred_check
          %p157 = pneg %p62
        $region34: #{tpu_custom_call.1} parent=27 // pred_check_branch
          %159 = sbr.rel (%p157) target = $region36
        $region35: #{tpu_custom_call.1} parent=27 // pred_region
          %160 = dma.done [#allocation6], 1024
        $region36: #{tpu_custom_call.1} parent=27 // pred_fallthru
          _
        %s161 = sand.u32 %s28, 1
        %s162 = scalar_lea.sflag [#allocation3], %s161
        %s163 = sand.u32 %s28, 1
        %s164 = smul.addr %s163, 128
        %s165 = scalar_lea.vmem [#allocation2], %s164
        %p166 = pneg %p41
        %p167 = pneg %p38
        %p168 = pneg %p62
        %p169 = pneg %p59
        %p170 = pneg %p88
        %p171 = pneg %p85
        %s172 = sand.u32 %s75, 1
        %s173 = scalar_lea.sflag [#allocation4], %s172
        %s174 = sand.u32 %s75, 1
        %s175 = smul.addr %s174, 128
        %s176 = scalar_lea.vmem [#allocation7], %s175
        %v177 = vld [vmem:[%s152] sm:$0xff]
        %v178 = vld [vmem:[%s152 + $0x8] sm:$0xff]
        %v179 = vld [vmem:[%s152 + $0x10] sm:$0xff]
        %v180 = vld [vmem:[%s152 + $0x18] sm:$0xff]
        %v181 = vld [vmem:[%s152 + $0x20] sm:$0xff]
        %v182 = vld [vmem:[%s152 + $0x28] sm:$0xff]
        %v183 = vld [vmem:[%s152 + $0x30] sm:$0xff]
        %v184 = vld [vmem:[%s152 + $0x38] sm:$0xff]
        %v185 = vld [vmem:[%s152 + $0x40] sm:$0xff]
        %v186 = vld [vmem:[%s152 + $0x48] sm:$0xff]
        %v187 = vld [vmem:[%s152 + $0x50] sm:$0xff]
        %v188 = vld [vmem:[%s152 + $0x58] sm:$0xff]
        %v189 = vld [vmem:[%s152 + $0x60] sm:$0xff]
        %v190 = vld [vmem:[%s152 + $0x68] sm:$0xff]
        %v191 = vld [vmem:[%s152 + $0x70] sm:$0xff]
        %v192 = vld [vmem:[%s152 + $0x78] sm:$0xff]
        %v210 = vrot.slane 0.0, 7
        %v211 = vrot.slane %v177, 7
        %v212 = vrot.slane %v178, 7
        %v213 = vrot.slane %v179, 7
        %v214 = vrot.slane %v180, 7
        %v215 = vrot.slane %v181, 7
        %v216 = vrot.slane %v182, 7
        %v217 = vrot.slane %v183, 7
        %v218 = vrot.slane %v184, 7
        %v219 = vrot.slane %v185, 7
        %v220 = vrot.slane %v186, 7
        %v221 = vrot.slane %v187, 7
        %v222 = vrot.slane %v188, 7
        %v223 = vrot.slane %v189, 7
        %v224 = vrot.slane %v190, 7
        %v225 = vrot.slane %v191, 7
        %v226 = vrot.slane %v192, 7
        %vm244 = vcmask 1040384
        %v245 = vsel %vm244, 0.0, %v210
        %v246 = vsel %vm244, 0.0, %v211
        %v247 = vsel %vm244, 0.0, %v212
        %v248 = vsel %vm244, 0.0, %v213
        %v249 = vsel %vm244, 0.0, %v214
        %v250 = vsel %vm244, 0.0, %v215
        %v251 = vsel %vm244, 0.0, %v216
        %v252 = vsel %vm244, 0.0, %v217
        %v253 = vsel %vm244, 0.0, %v218
        %v254 = vsel %vm244, 0.0, %v219
        %v255 = vsel %vm244, 0.0, %v220
        %v256 = vsel %vm244, 0.0, %v221
        %v257 = vsel %vm244, 0.0, %v222
        %v258 = vsel %vm244, 0.0, %v223
        %v259 = vsel %vm244, 0.0, %v224
        %v260 = vsel %vm244, 0.0, %v225
        %v261 = vsel %vm244, 0.0, %v226
        %v262 = vsel %vm244, %v210, 0.0
        %v263 = vsel %vm244, %v211, 0.0
        %v264 = vsel %vm244, %v212, 0.0
        %v265 = vsel %vm244, %v213, 0.0
        %v266 = vsel %vm244, %v214, 0.0
        %v267 = vsel %vm244, %v215, 0.0
        %v268 = vsel %vm244, %v216, 0.0
        %v269 = vsel %vm244, %v217, 0.0
        %v270 = vsel %vm244, %v218, 0.0
        %v271 = vsel %vm244, %v219, 0.0
        %v272 = vsel %vm244, %v220, 0.0
        %v273 = vsel %vm244, %v221, 0.0
        %v274 = vsel %vm244, %v222, 0.0
        %v275 = vsel %vm244, %v223, 0.0
        %v276 = vsel %vm244, %v224, 0.0
        %v277 = vsel %vm244, %v225, 0.0
        %v278 = vsel %vm244, %v226, 0.0
        %s279 = scalar_lea.vmem [#allocation5], 17
        %v280 = vld [vmem:[%s279] ss:$8 sm:$0x3]
        %v282 = vlaneseq
        %v283 = vshrl.u32 %v282, 7
        %v284 = vsub.s32 0, %v283
        %v285 = vrot.slane %v280, %v284
        %v286 = vlaneseq
        %v287 = vshrl.u32 %v286, 7
        %v288 = vsub.s32 1, %v287
        %v289 = vrot.slane %v280, %v288
        %v292 = vadd.f32 %v285, 0.0
        %v293 = vadd.f32 %v289, 0.0
        %v294 = vld [vmem:[#allocation5] ss:$8 sm:$0x3]
        %v296 = vlaneseq
        %v297 = vshrl.u32 %v296, 7
        %v298 = vsub.s32 0, %v297
        %v299 = vrot.slane %v294, %v298
        %v300 = vlaneseq
        %v301 = vshrl.u32 %v300, 7
        %v302 = vsub.s32 1, %v301
        %v303 = vrot.slane %v294, %v302
        %v306 = vmul.f32 %v245, %v299
        %v307 = vmul.f32 %v245, %v303
        %v308 = vmul.f32 %v246, %v299
        %v309 = vmul.f32 %v247, %v303
        %v310 = vmul.f32 %v248, %v299
        %v311 = vmul.f32 %v249, %v303
        %v312 = vmul.f32 %v250, %v299
        %v313 = vmul.f32 %v251, %v303
        %v314 = vmul.f32 %v252, %v299
        %v315 = vmul.f32 %v253, %v303
        %v316 = vmul.f32 %v254, %v299
        %v317 = vmul.f32 %v255, %v303
        %v318 = vmul.f32 %v256, %v299
        %v319 = vmul.f32 %v257, %v303
        %v320 = vmul.f32 %v258, %v299
        %v321 = vmul.f32 %v259, %v303
        %v322 = vadd.f32 %v292, %v306
        %v323 = vadd.f32 %v293, %v307
        %v324 = vadd.f32 %v292, %v308
        %v325 = vadd.f32 %v293, %v309
        %v326 = vadd.f32 %v292, %v310
        %v327 = vadd.f32 %v293, %v311
        %v328 = vadd.f32 %v292, %v312
        %v329 = vadd.f32 %v293, %v313
        %v330 = vadd.f32 %v292, %v314
        %v331 = vadd.f32 %v293, %v315
        %v332 = vadd.f32 %v292, %v316
        %v333 = vadd.f32 %v293, %v317
        %v334 = vadd.f32 %v292, %v318
        %v335 = vadd.f32 %v293, %v319
        %v336 = vadd.f32 %v292, %v320
        %v337 = vadd.f32 %v293, %v321
        %s338 = scalar_lea.vmem [#allocation5], 1
        %v339 = vld [vmem:[%s338] ss:$8 sm:$0x3]
        %v341 = vlaneseq
        %v342 = vshrl.u32 %v341, 7
        %v343 = vsub.s32 0, %v342
        %v344 = vrot.slane %v339, %v343
        %v345 = vlaneseq
        %v346 = vshrl.u32 %v345, 7
        %v347 = vsub.s32 1, %v346
        %v348 = vrot.slane %v339, %v347
        %v351 = vmul.f32 %v245, %v344
        %v352 = vmul.f32 %v245, %v348
        %v353 = vmul.f32 %v262, %v344
        %v354 = vmul.f32 %v262, %v348
        %v355 = vmul.f32 %v246, %v344
        %v356 = vmul.f32 %v247, %v348
        %v357 = vmul.f32 %v263, %v344
        %v358 = vmul.f32 %v264, %v348
        %v359 = vmul.f32 %v248, %v344
        %v360 = vmul.f32 %v249, %v348
        %v361 = vmul.f32 %v265, %v344
        %v362 = vmul.f32 %v266, %v348
        %v363 = vmul.f32 %v250, %v344
        %v364 = vmul.f32 %v251, %v348
        %v365 = vmul.f32 %v267, %v344
        %v366 = vmul.f32 %v268, %v348
        %v367 = vmul.f32 %v252, %v344
        %v368 = vmul.f32 %v253, %v348
        %v369 = vmul.f32 %v269, %v344
        %v370 = vmul.f32 %v270, %v348
        %v371 = vmul.f32 %v254, %v344
        %v372 = vmul.f32 %v255, %v348
        %v373 = vmul.f32 %v271, %v344
        %v374 = vmul.f32 %v272, %v348
        %v375 = vmul.f32 %v256, %v344
        %v376 = vmul.f32 %v257, %v348
        %v377 = vmul.f32 %v273, %v344
        %v378 = vmul.f32 %v274, %v348
        %v379 = vmul.f32 %v258, %v344
        %v380 = vmul.f32 %v259, %v348
        %v381 = vmul.f32 %v275, %v344
        %v382 = vmul.f32 %v276, %v348
        %vm415 = vcmask 1046528
        %v416 = vrot.slane %v351, 1
        %v417 = vrot.slane %v353, 1
        %v418 = vsel %vm415, %v416, %v417
        %v419 = vrot.slane %v352, 1
        %v420 = vrot.slane %v354, 1
        %v421 = vsel %vm415, %v419, %v420
        %v422 = vrot.slane %v355, 1
        %v423 = vrot.slane %v357, 1
        %v424 = vsel %vm415, %v422, %v423
        %v425 = vrot.slane %v356, 1
        %v426 = vrot.slane %v358, 1
        %v427 = vsel %vm415, %v425, %v426
        %v428 = vrot.slane %v359, 1
        %v429 = vrot.slane %v361, 1
        %v430 = vsel %vm415, %v428, %v429
        %v431 = vrot.slane %v360, 1
        %v432 = vrot.slane %v362, 1
        %v433 = vsel %vm415, %v431, %v432
        %v434 = vrot.slane %v363, 1
        %v435 = vrot.slane %v365, 1
        %v436 = vsel %vm415, %v434, %v435
        %v437 = vrot.slane %v364, 1
        %v438 = vrot.slane %v366, 1
        %v439 = vsel %vm415, %v437, %v438
        %v440 = vrot.slane %v367, 1
        %v441 = vrot.slane %v369, 1
        %v442 = vsel %vm415, %v440, %v441
        %v443 = vrot.slane %v368, 1
        %v444 = vrot.slane %v370, 1
        %v445 = vsel %vm415, %v443, %v444
        %v446 = vrot.slane %v371, 1
        %v447 = vrot.slane %v373, 1
        %v448 = vsel %vm415, %v446, %v447
        %v449 = vrot.slane %v372, 1
        %v450 = vrot.slane %v374, 1
        %v451 = vsel %vm415, %v449, %v450
        %v452 = vrot.slane %v375, 1
        %v453 = vrot.slane %v377, 1
        %v454 = vsel %vm415, %v452, %v453
        %v455 = vrot.slane %v376, 1
        %v456 = vrot.slane %v378, 1
        %v457 = vsel %vm415, %v455, %v456
        %v458 = vrot.slane %v379, 1
        %v459 = vrot.slane %v381, 1
        %v460 = vsel %vm415, %v458, %v459
        %v461 = vrot.slane %v380, 1
        %v462 = vrot.slane %v382, 1
        %v463 = vsel %vm415, %v461, %v462
        %v480 = vadd.f32 %v322, %v418
        %v481 = vadd.f32 %v323, %v421
        %v482 = vadd.f32 %v324, %v424
        %v483 = vadd.f32 %v325, %v427
        %v484 = vadd.f32 %v326, %v430
        %v485 = vadd.f32 %v327, %v433
        %v486 = vadd.f32 %v328, %v436
        %v487 = vadd.f32 %v329, %v439
        %v488 = vadd.f32 %v330, %v442
        %v489 = vadd.f32 %v331, %v445
        %v490 = vadd.f32 %v332, %v448
        %v491 = vadd.f32 %v333, %v451
        %v492 = vadd.f32 %v334, %v454
        %v493 = vadd.f32 %v335, %v457
        %v494 = vadd.f32 %v336, %v460
        %v495 = vadd.f32 %v337, %v463
        %s496 = scalar_lea.vmem [#allocation5], 2
        %v497 = vld [vmem:[%s496] ss:$8 sm:$0x3]
        %v499 = vlaneseq
        %v500 = vshrl.u32 %v499, 7
        %v501 = vsub.s32 0, %v500
        %v502 = vrot.slane %v497, %v501
        %v503 = vlaneseq
        %v504 = vshrl.u32 %v503, 7
        %v505 = vsub.s32 1, %v504
        %v506 = vrot.slane %v497, %v505
        %v509 = vmul.f32 %v245, %v502
        %v510 = vmul.f32 %v245, %v506
        %v511 = vmul.f32 %v262, %v502
        %v512 = vmul.f32 %v262, %v506
        %v513 = vmul.f32 %v246, %v502
        %v514 = vmul.f32 %v247, %v506
        %v515 = vmul.f32 %v263, %v502
        %v516 = vmul.f32 %v264, %v506
        %v517 = vmul.f32 %v248, %v502
        %v518 = vmul.f32 %v249, %v506
        %v519 = vmul.f32 %v265, %v502
        %v520 = vmul.f32 %v266, %v506
        %v521 = vmul.f32 %v250, %v502
        %v522 = vmul.f32 %v251, %v506
        %v523 = vmul.f32 %v267, %v502
        %v524 = vmul.f32 %v268, %v506
        %v525 = vmul.f32 %v252, %v502
        %v526 = vmul.f32 %v253, %v506
        %v527 = vmul.f32 %v269, %v502
        %v528 = vmul.f32 %v270, %v506
        %v529 = vmul.f32 %v254, %v502
        %v530 = vmul.f32 %v255, %v506
        %v531 = vmul.f32 %v271, %v502
        %v532 = vmul.f32 %v272, %v506
        %v533 = vmul.f32 %v256, %v502
        %v534 = vmul.f32 %v257, %v506
        %v535 = vmul.f32 %v273, %v502
        %v536 = vmul.f32 %v274, %v506
        %v537 = vmul.f32 %v258, %v502
        %v538 = vmul.f32 %v259, %v506
        %v539 = vmul.f32 %v275, %v502
        %v540 = vmul.f32 %v276, %v506
        %vm573 = vcmask 1045504
        %v574 = vrot.slane %v509, 2
        %v575 = vrot.slane %v511, 2
        %v576 = vsel %vm573, %v574, %v575
        %v577 = vrot.slane %v510, 2
        %v578 = vrot.slane %v512, 2
        %v579 = vsel %vm573, %v577, %v578
        %v580 = vrot.slane %v513, 2
        %v581 = vrot.slane %v515, 2
        %v582 = vsel %vm573, %v580, %v581
        %v583 = vrot.slane %v514, 2
        %v584 = vrot.slane %v516, 2
        %v585 = vsel %vm573, %v583, %v584
        %v586 = vrot.slane %v517, 2
        %v587 = vrot.slane %v519, 2
        %v588 = vsel %vm573, %v586, %v587
        %v589 = vrot.slane %v518, 2
        %v590 = vrot.slane %v520, 2
        %v591 = vsel %vm573, %v589, %v590
        %v592 = vrot.slane %v521, 2
        %v593 = vrot.slane %v523, 2
        %v594 = vsel %vm573, %v592, %v593
        %v595 = vrot.slane %v522, 2
        %v596 = vrot.slane %v524, 2
        %v597 = vsel %vm573, %v595, %v596
        %v598 = vrot.slane %v525, 2
        %v599 = vrot.slane %v527, 2
        %v600 = vsel %vm573, %v598, %v599
        %v601 = vrot.slane %v526, 2
        %v602 = vrot.slane %v528, 2
        %v603 = vsel %vm573, %v601, %v602
        %v604 = vrot.slane %v529, 2
        %v605 = vrot.slane %v531, 2
        %v606 = vsel %vm573, %v604, %v605
        %v607 = vrot.slane %v530, 2
        %v608 = vrot.slane %v532, 2
        %v609 = vsel %vm573, %v607, %v608
        %v610 = vrot.slane %v533, 2
        %v611 = vrot.slane %v535, 2
        %v612 = vsel %vm573, %v610, %v611
        %v613 = vrot.slane %v534, 2
        %v614 = vrot.slane %v536, 2
        %v615 = vsel %vm573, %v613, %v614
        %v616 = vrot.slane %v537, 2
        %v617 = vrot.slane %v539, 2
        %v618 = vsel %vm573, %v616, %v617
        %v619 = vrot.slane %v538, 2
        %v620 = vrot.slane %v540, 2
        %v621 = vsel %vm573, %v619, %v620
        %v638 = vadd.f32 %v480, %v576
        %v639 = vadd.f32 %v481, %v579
        %v640 = vadd.f32 %v482, %v582
        %v641 = vadd.f32 %v483, %v585
        %v642 = vadd.f32 %v484, %v588
        %v643 = vadd.f32 %v485, %v591
        %v644 = vadd.f32 %v486, %v594
        %v645 = vadd.f32 %v487, %v597
        %v646 = vadd.f32 %v488, %v600
        %v647 = vadd.f32 %v489, %v603
        %v648 = vadd.f32 %v490, %v606
        %v649 = vadd.f32 %v491, %v609
        %v650 = vadd.f32 %v492, %v612
        %v651 = vadd.f32 %v493, %v615
        %v652 = vadd.f32 %v494, %v618
        %v653 = vadd.f32 %v495, %v621
        %s654 = scalar_lea.vmem [#allocation5], 3
        %v655 = vld [vmem:[%s654] ss:$8 sm:$0x3]
        %v657 = vlaneseq
        %v658 = vshrl.u32 %v657, 7
        %v659 = vsub.s32 0, %v658
        %v660 = vrot.slane %v655, %v659
        %v661 = vlaneseq
        %v662 = vshrl.u32 %v661, 7
        %v663 = vsub.s32 1, %v662
        %v664 = vrot.slane %v655, %v663
        %v667 = vmul.f32 %v246, %v660
        %v668 = vmul.f32 %v247, %v664
        %v669 = vmul.f32 %v248, %v660
        %v670 = vmul.f32 %v249, %v664
        %v671 = vmul.f32 %v250, %v660
        %v672 = vmul.f32 %v251, %v664
        %v673 = vmul.f32 %v252, %v660
        %v674 = vmul.f32 %v253, %v664
        %v675 = vmul.f32 %v254, %v660
        %v676 = vmul.f32 %v255, %v664
        %v677 = vmul.f32 %v256, %v660
        %v678 = vmul.f32 %v257, %v664
        %v679 = vmul.f32 %v258, %v660
        %v680 = vmul.f32 %v259, %v664
        %v681 = vmul.f32 %v260, %v660
        %v682 = vmul.f32 %v261, %v664
        %v683 = vadd.f32 %v638, %v667
        %v684 = vadd.f32 %v639, %v668
        %v685 = vadd.f32 %v640, %v669
        %v686 = vadd.f32 %v641, %v670
        %v687 = vadd.f32 %v642, %v671
        %v688 = vadd.f32 %v643, %v672
        %v689 = vadd.f32 %v644, %v673
        %v690 = vadd.f32 %v645, %v674
        %v691 = vadd.f32 %v646, %v675
        %v692 = vadd.f32 %v647, %v676
        %v693 = vadd.f32 %v648, %v677
        %v694 = vadd.f32 %v649, %v678
        %v695 = vadd.f32 %v650, %v679
        %v696 = vadd.f32 %v651, %v680
        %v697 = vadd.f32 %v652, %v681
        %v698 = vadd.f32 %v653, %v682
        %s699 = scalar_lea.vmem [#allocation5], 4
        %v700 = vld [vmem:[%s699] ss:$8 sm:$0x3]
        %v702 = vlaneseq
        %v703 = vshrl.u32 %v702, 7
        %v704 = vsub.s32 0, %v703
        %v705 = vrot.slane %v700, %v704
        %v706 = vlaneseq
        %v707 = vshrl.u32 %v706, 7
        %v708 = vsub.s32 1, %v707
        %v709 = vrot.slane %v700, %v708
        %v712 = vmul.f32 %v246, %v705
        %v713 = vmul.f32 %v247, %v709
        %v714 = vmul.f32 %v263, %v705
        %v715 = vmul.f32 %v264, %v709
        %v716 = vmul.f32 %v248, %v705
        %v717 = vmul.f32 %v249, %v709
        %v718 = vmul.f32 %v265, %v705
        %v719 = vmul.f32 %v266, %v709
        %v720 = vmul.f32 %v250, %v705
        %v721 = vmul.f32 %v251, %v709
        %v722 = vmul.f32 %v267, %v705
        %v723 = vmul.f32 %v268, %v709
        %v724 = vmul.f32 %v252, %v705
        %v725 = vmul.f32 %v253, %v709
        %v726 = vmul.f32 %v269, %v705
        %v727 = vmul.f32 %v270, %v709
        %v728 = vmul.f32 %v254, %v705
        %v729 = vmul.f32 %v255, %v709
        %v730 = vmul.f32 %v271, %v705
        %v731 = vmul.f32 %v272, %v709
        %v732 = vmul.f32 %v256, %v705
        %v733 = vmul.f32 %v257, %v709
        %v734 = vmul.f32 %v273, %v705
        %v735 = vmul.f32 %v274, %v709
        %v736 = vmul.f32 %v258, %v705
        %v737 = vmul.f32 %v259, %v709
        %v738 = vmul.f32 %v275, %v705
        %v739 = vmul.f32 %v276, %v709
        %v740 = vmul.f32 %v260, %v705
        %v741 = vmul.f32 %v261, %v709
        %v742 = vmul.f32 %v277, %v705
        %v743 = vmul.f32 %v278, %v709
        %v776 = vrot.slane %v712, 1
        %v777 = vrot.slane %v714, 1
        %v778 = vsel %vm415, %v776, %v777
        %v779 = vrot.slane %v713, 1
        %v780 = vrot.slane %v715, 1
        %v781 = vsel %vm415, %v779, %v780
        %v782 = vrot.slane %v716, 1
        %v783 = vrot.slane %v718, 1
        %v784 = vsel %vm415, %v782, %v783
        %v785 = vrot.slane %v717, 1
        %v786 = vrot.slane %v719, 1
        %v787 = vsel %vm415, %v785, %v786
        %v788 = vrot.slane %v720, 1
        %v789 = vrot.slane %v722, 1
        %v790 = vsel %vm415, %v788, %v789
        %v791 = vrot.slane %v721, 1
        %v792 = vrot.slane %v723, 1
        %v793 = vsel %vm415, %v791, %v792
        %v794 = vrot.slane %v724, 1
        %v795 = vrot.slane %v726, 1
        %v796 = vsel %vm415, %v794, %v795
        %v797 = vrot.slane %v725, 1
        %v798 = vrot.slane %v727, 1
        %v799 = vsel %vm415, %v797, %v798
        %v800 = vrot.slane %v728, 1
        %v801 = vrot.slane %v730, 1
        %v802 = vsel %vm415, %v800, %v801
        %v803 = vrot.slane %v729, 1
        %v804 = vrot.slane %v731, 1
        %v805 = vsel %vm415, %v803, %v804
        %v806 = vrot.slane %v732, 1
        %v807 = vrot.slane %v734, 1
        %v808 = vsel %vm415, %v806, %v807
        %v809 = vrot.slane %v733, 1
        %v810 = vrot.slane %v735, 1
        %v811 = vsel %vm415, %v809, %v810
        %v812 = vrot.slane %v736, 1
        %v813 = vrot.slane %v738, 1
        %v814 = vsel %vm415, %v812, %v813
        %v815 = vrot.slane %v737, 1
        %v816 = vrot.slane %v739, 1
        %v817 = vsel %vm415, %v815, %v816
        %v818 = vrot.slane %v740, 1
        %v819 = vrot.slane %v742, 1
        %v820 = vsel %vm415, %v818, %v819
        %v821 = vrot.slane %v741, 1
        %v822 = vrot.slane %v743, 1
        %v823 = vsel %vm415, %v821, %v822
        %v840 = vadd.f32 %v683, %v778
        %v841 = vadd.f32 %v684, %v781
        %v842 = vadd.f32 %v685, %v784
        %v843 = vadd.f32 %v686, %v787
        %v844 = vadd.f32 %v687, %v790
        %v845 = vadd.f32 %v688, %v793
        %v846 = vadd.f32 %v689, %v796
        %v847 = vadd.f32 %v690, %v799
        %v848 = vadd.f32 %v691, %v802
        %v849 = vadd.f32 %v692, %v805
        %v850 = vadd.f32 %v693, %v808
        %v851 = vadd.f32 %v694, %v811
        %v852 = vadd.f32 %v695, %v814
        %v853 = vadd.f32 %v696, %v817
        %v854 = vadd.f32 %v697, %v820
        %v855 = vadd.f32 %v698, %v823
        %s856 = scalar_lea.vmem [#allocation5], 5
        %v857 = vld [vmem:[%s856] ss:$8 sm:$0x3]
        %v859 = vlaneseq
        %v860 = vshrl.u32 %v859, 7
        %v861 = vsub.s32 0, %v860
        %v862 = vrot.slane %v857, %v861
        %v863 = vlaneseq
        %v864 = vshrl.u32 %v863, 7
        %v865 = vsub.s32 1, %v864
        %v866 = vrot.slane %v857, %v865
        %v869 = vmul.f32 %v246, %v862
        %v870 = vmul.f32 %v247, %v866
        %v871 = vmul.f32 %v263, %v862
        %v872 = vmul.f32 %v264, %v866
        %v873 = vmul.f32 %v248, %v862
        %v874 = vmul.f32 %v249, %v866
        %v875 = vmul.f32 %v265, %v862
        %v876 = vmul.f32 %v266, %v866
        %v877 = vmul.f32 %v250, %v862
        %v878 = vmul.f32 %v251, %v866
        %v879 = vmul.f32 %v267, %v862
        %v880 = vmul.f32 %v268, %v866
        %v881 = vmul.f32 %v252, %v862
        %v882 = vmul.f32 %v253, %v866
        %v883 = vmul.f32 %v269, %v862
        %v884 = vmul.f32 %v270, %v866
        %v885 = vmul.f32 %v254, %v862
        %v886 = vmul.f32 %v255, %v866
        %v887 = vmul.f32 %v271, %v862
        %v888 = vmul.f32 %v272, %v866
        %v889 = vmul.f32 %v256, %v862
        %v890 = vmul.f32 %v257, %v866
        %v891 = vmul.f32 %v273, %v862
        %v892 = vmul.f32 %v274, %v866
        %v893 = vmul.f32 %v258, %v862
        %v894 = vmul.f32 %v259, %v866
        %v895 = vmul.f32 %v275, %v862
        %v896 = vmul.f32 %v276, %v866
        %v897 = vmul.f32 %v260, %v862
        %v898 = vmul.f32 %v261, %v866
        %v899 = vmul.f32 %v277, %v862
        %v900 = vmul.f32 %v278, %v866
        %v933 = vrot.slane %v869, 2
        %v934 = vrot.slane %v871, 2
        %v935 = vsel %vm573, %v933, %v934
        %v936 = vrot.slane %v870, 2
        %v937 = vrot.slane %v872, 2
        %v938 = vsel %vm573, %v936, %v937
        %v939 = vrot.slane %v873, 2
        %v940 = vrot.slane %v875, 2
        %v941 = vsel %vm573, %v939, %v940
        %v942 = vrot.slane %v874, 2
        %v943 = vrot.slane %v876, 2
        %v944 = vsel %vm573, %v942, %v943
        %v945 = vrot.slane %v877, 2
        %v946 = vrot.slane %v879, 2
        %v947 = vsel %vm573, %v945, %v946
        %v948 = vrot.slane %v878, 2
        %v949 = vrot.slane %v880, 2
        %v950 = vsel %vm573, %v948, %v949
        %v951 = vrot.slane %v881, 2
        %v952 = vrot.slane %v883, 2
        %v953 = vsel %vm573, %v951, %v952
        %v954 = vrot.slane %v882, 2
        %v955 = vrot.slane %v884, 2
        %v956 = vsel %vm573, %v954, %v955
        %v957 = vrot.slane %v885, 2
        %v958 = vrot.slane %v887, 2
        %v959 = vsel %vm573, %v957, %v958
        %v960 = vrot.slane %v886, 2
        %v961 = vrot.slane %v888, 2
        %v962 = vsel %vm573, %v960, %v961
        %v963 = vrot.slane %v889, 2
        %v964 = vrot.slane %v891, 2
        %v965 = vsel %vm573, %v963, %v964
        %v966 = vrot.slane %v890, 2
        %v967 = vrot.slane %v892, 2
        %v968 = vsel %vm573, %v966, %v967
        %v969 = vrot.slane %v893, 2
        %v970 = vrot.slane %v895, 2
        %v971 = vsel %vm573, %v969, %v970
        %v972 = vrot.slane %v894, 2
        %v973 = vrot.slane %v896, 2
        %v974 = vsel %vm573, %v972, %v973
        %v975 = vrot.slane %v897, 2
        %v976 = vrot.slane %v899, 2
        %v977 = vsel %vm573, %v975, %v976
        %v978 = vrot.slane %v898, 2
        %v979 = vrot.slane %v900, 2
        %v980 = vsel %vm573, %v978, %v979
        %v997 = vadd.f32 %v840, %v935
        %v998 = vadd.f32 %v841, %v938
        %v999 = vadd.f32 %v842, %v941
        %v1000 = vadd.f32 %v843, %v944
        %v1001 = vadd.f32 %v844, %v947
        %v1002 = vadd.f32 %v845, %v950
        %v1003 = vadd.f32 %v846, %v953
        %v1004 = vadd.f32 %v847, %v956
        %v1005 = vadd.f32 %v848, %v959
        %v1006 = vadd.f32 %v849, %v962
        %v1007 = vadd.f32 %v850, %v965
        %v1008 = vadd.f32 %v851, %v968
        %v1009 = vadd.f32 %v852, %v971
        %v1010 = vadd.f32 %v853, %v974
        %v1011 = vadd.f32 %v854, %v977
        %v1012 = vadd.f32 %v855, %v980
        %s1013 = scalar_lea.vmem [#allocation5], 6
        %v1014 = vld [vmem:[%s1013] ss:$8 sm:$0x3]
        %v1016 = vlaneseq
        %v1017 = vshrl.u32 %v1016, 7
        %v1018 = vsub.s32 0, %v1017
        %v1019 = vrot.slane %v1014, %v1018
        %v1020 = vlaneseq
        %v1021 = vshrl.u32 %v1020, 7
        %v1022 = vsub.s32 1, %v1021
        %v1023 = vrot.slane %v1014, %v1022
        %v1026 = vmul.f32 %v248, %v1019
        %v1027 = vmul.f32 %v249, %v1023
        %v1028 = vmul.f32 %v250, %v1019
        %v1029 = vmul.f32 %v251, %v1023
        %v1030 = vmul.f32 %v252, %v1019
        %v1031 = vmul.f32 %v253, %v1023
        %v1032 = vmul.f32 %v254, %v1019
        %v1033 = vmul.f32 %v255, %v1023
        %v1034 = vmul.f32 %v256, %v1019
        %v1035 = vmul.f32 %v257, %v1023
        %v1036 = vmul.f32 %v258, %v1019
        %v1037 = vmul.f32 %v259, %v1023
        %v1038 = vmul.f32 %v260, %v1019
        %v1039 = vmul.f32 %v261, %v1023
        %v1040 = vmul.f32 %v245, %v1019
        %v1041 = vmul.f32 %v245, %v1023
        %v1042 = vadd.f32 %v997, %v1026
        %v1043 = vadd.f32 %v998, %v1027
        %v1044 = vadd.f32 %v999, %v1028
        %v1045 = vadd.f32 %v1000, %v1029
        %v1046 = vadd.f32 %v1001, %v1030
        %v1047 = vadd.f32 %v1002, %v1031
        %v1048 = vadd.f32 %v1003, %v1032
        %v1049 = vadd.f32 %v1004, %v1033
        %v1050 = vadd.f32 %v1005, %v1034
        %v1051 = vadd.f32 %v1006, %v1035
        %v1052 = vadd.f32 %v1007, %v1036
        %v1053 = vadd.f32 %v1008, %v1037
        %v1054 = vadd.f32 %v1009, %v1038
        %v1055 = vadd.f32 %v1010, %v1039
        %v1056 = vadd.f32 %v1011, %v1040
        %v1057 = vadd.f32 %v1012, %v1041
        %s1058 = scalar_lea.vmem [#allocation5], 7
        %v1059 = vld [vmem:[%s1058] ss:$8 sm:$0x3]
        %v1061 = vlaneseq
        %v1062 = vshrl.u32 %v1061, 7
        %v1063 = vsub.s32 0, %v1062
        %v1064 = vrot.slane %v1059, %v1063
        %v1065 = vlaneseq
        %v1066 = vshrl.u32 %v1065, 7
        %v1067 = vsub.s32 1, %v1066
        %v1068 = vrot.slane %v1059, %v1067
        %v1071 = vmul.f32 %v248, %v1064
        %v1072 = vmul.f32 %v249, %v1068
        %v1073 = vmul.f32 %v265, %v1064
        %v1074 = vmul.f32 %v266, %v1068
        %v1075 = vmul.f32 %v250, %v1064
        %v1076 = vmul.f32 %v251, %v1068
        %v1077 = vmul.f32 %v267, %v1064
        %v1078 = vmul.f32 %v268, %v1068
        %v1079 = vmul.f32 %v252, %v1064
        %v1080 = vmul.f32 %v253, %v1068
        %v1081 = vmul.f32 %v269, %v1064
        %v1082 = vmul.f32 %v270, %v1068
        %v1083 = vmul.f32 %v254, %v1064
        %v1084 = vmul.f32 %v255, %v1068
        %v1085 = vmul.f32 %v271, %v1064
        %v1086 = vmul.f32 %v272, %v1068
        %v1087 = vmul.f32 %v256, %v1064
        %v1088 = vmul.f32 %v257, %v1068
        %v1089 = vmul.f32 %v273, %v1064
        %v1090 = vmul.f32 %v274, %v1068
        %v1091 = vmul.f32 %v258, %v1064
        %v1092 = vmul.f32 %v259, %v1068
        %v1093 = vmul.f32 %v275, %v1064
        %v1094 = vmul.f32 %v276, %v1068
        %v1095 = vmul.f32 %v260, %v1064
        %v1096 = vmul.f32 %v261, %v1068
        %v1097 = vmul.f32 %v277, %v1064
        %v1098 = vmul.f32 %v278, %v1068
        %v1099 = vmul.f32 %v245, %v1064
        %v1100 = vmul.f32 %v245, %v1068
        %v1101 = vmul.f32 %v262, %v1064
        %v1102 = vmul.f32 %v262, %v1068
        %v1135 = vrot.slane %v1071, 1
        %v1136 = vrot.slane %v1073, 1
        %v1137 = vsel %vm415, %v1135, %v1136
        %v1138 = vrot.slane %v1072, 1
        %v1139 = vrot.slane %v1074, 1
        %v1140 = vsel %vm415, %v1138, %v1139
        %v1141 = vrot.slane %v1075, 1
        %v1142 = vrot.slane %v1077, 1
        %v1143 = vsel %vm415, %v1141, %v1142
        %v1144 = vrot.slane %v1076, 1
        %v1145 = vrot.slane %v1078, 1
        %v1146 = vsel %vm415, %v1144, %v1145
        %v1147 = vrot.slane %v1079, 1
        %v1148 = vrot.slane %v1081, 1
        %v1149 = vsel %vm415, %v1147, %v1148
        %v1150 = vrot.slane %v1080, 1
        %v1151 = vrot.slane %v1082, 1
        %v1152 = vsel %vm415, %v1150, %v1151
        %v1153 = vrot.slane %v1083, 1
        %v1154 = vrot.slane %v1085, 1
        %v1155 = vsel %vm415, %v1153, %v1154
        %v1156 = vrot.slane %v1084, 1
        %v1157 = vrot.slane %v1086, 1
        %v1158 = vsel %vm415, %v1156, %v1157
        %v1159 = vrot.slane %v1087, 1
        %v1160 = vrot.slane %v1089, 1
        %v1161 = vsel %vm415, %v1159, %v1160
        %v1162 = vrot.slane %v1088, 1
        %v1163 = vrot.slane %v1090, 1
        %v1164 = vsel %vm415, %v1162, %v1163
        %v1165 = vrot.slane %v1091, 1
        %v1166 = vrot.slane %v1093, 1
        %v1167 = vsel %vm415, %v1165, %v1166
        %v1168 = vrot.slane %v1092, 1
        %v1169 = vrot.slane %v1094, 1
        %v1170 = vsel %vm415, %v1168, %v1169
        %v1171 = vrot.slane %v1095, 1
        %v1172 = vrot.slane %v1097, 1
        %v1173 = vsel %vm415, %v1171, %v1172
        %v1174 = vrot.slane %v1096, 1
        %v1175 = vrot.slane %v1098, 1
        %v1176 = vsel %vm415, %v1174, %v1175
        %v1177 = vrot.slane %v1099, 1
        %v1178 = vrot.slane %v1101, 1
        %v1179 = vsel %vm415, %v1177, %v1178
        %v1180 = vrot.slane %v1100, 1
        %v1181 = vrot.slane %v1102, 1
        %v1182 = vsel %vm415, %v1180, %v1181
        %v1199 = vadd.f32 %v1042, %v1137
        %v1200 = vadd.f32 %v1043, %v1140
        %v1201 = vadd.f32 %v1044, %v1143
        %v1202 = vadd.f32 %v1045, %v1146
        %v1203 = vadd.f32 %v1046, %v1149
        %v1204 = vadd.f32 %v1047, %v1152
        %v1205 = vadd.f32 %v1048, %v1155
        %v1206 = vadd.f32 %v1049, %v1158
        %v1207 = vadd.f32 %v1050, %v1161
        %v1208 = vadd.f32 %v1051, %v1164
        %v1209 = vadd.f32 %v1052, %v1167
        %v1210 = vadd.f32 %v1053, %v1170
        %v1211 = vadd.f32 %v1054, %v1173
        %v1212 = vadd.f32 %v1055, %v1176
        %v1213 = vadd.f32 %v1056, %v1179
        %v1214 = vadd.f32 %v1057, %v1182
        %s1215 = scalar_lea.vmem [#allocation5], 16
        %v1216 = vld [vmem:[%s1215] ss:$8 sm:$0x3]
        %v1218 = vlaneseq
        %v1219 = vshrl.u32 %v1218, 7
        %v1220 = vsub.s32 0, %v1219
        %v1221 = vrot.slane %v1216, %v1220
        %v1222 = vlaneseq
        %v1223 = vshrl.u32 %v1222, 7
        %v1224 = vsub.s32 1, %v1223
        %v1225 = vrot.slane %v1216, %v1224
        %v1228 = vmul.f32 %v248, %v1221
        %v1229 = vmul.f32 %v249, %v1225
        %v1230 = vmul.f32 %v265, %v1221
        %v1231 = vmul.f32 %v266, %v1225
        %v1232 = vmul.f32 %v250, %v1221
        %v1233 = vmul.f32 %v251, %v1225
        %v1234 = vmul.f32 %v267, %v1221
        %v1235 = vmul.f32 %v268, %v1225
        %v1236 = vmul.f32 %v252, %v1221
        %v1237 = vmul.f32 %v253, %v1225
        %v1238 = vmul.f32 %v269, %v1221
        %v1239 = vmul.f32 %v270, %v1225
        %v1240 = vmul.f32 %v254, %v1221
        %v1241 = vmul.f32 %v255, %v1225
        %v1242 = vmul.f32 %v271, %v1221
        %v1243 = vmul.f32 %v272, %v1225
        %v1244 = vmul.f32 %v256, %v1221
        %v1245 = vmul.f32 %v257, %v1225
        %v1246 = vmul.f32 %v273, %v1221
        %v1247 = vmul.f32 %v274, %v1225
        %v1248 = vmul.f32 %v258, %v1221
        %v1249 = vmul.f32 %v259, %v1225
        %v1250 = vmul.f32 %v275, %v1221
        %v1251 = vmul.f32 %v276, %v1225
        %v1252 = vmul.f32 %v260, %v1221
        %v1253 = vmul.f32 %v261, %v1225
        %v1254 = vmul.f32 %v277, %v1221
        %v1255 = vmul.f32 %v278, %v1225
        %v1256 = vmul.f32 %v245, %v1221
        %v1257 = vmul.f32 %v245, %v1225
        %v1258 = vmul.f32 %v262, %v1221
        %v1259 = vmul.f32 %v262, %v1225
        %v1292 = vrot.slane %v1228, 2
        %v1293 = vrot.slane %v1230, 2
        %v1294 = vsel %vm573, %v1292, %v1293
        %v1295 = vrot.slane %v1229, 2
        %v1296 = vrot.slane %v1231, 2
        %v1297 = vsel %vm573, %v1295, %v1296
        %v1298 = vrot.slane %v1232, 2
        %v1299 = vrot.slane %v1234, 2
        %v1300 = vsel %vm573, %v1298, %v1299
        %v1301 = vrot.slane %v1233, 2
        %v1302 = vrot.slane %v1235, 2
        %v1303 = vsel %vm573, %v1301, %v1302
        %v1304 = vrot.slane %v1236, 2
        %v1305 = vrot.slane %v1238, 2
        %v1306 = vsel %vm573, %v1304, %v1305
        %v1307 = vrot.slane %v1237, 2
        %v1308 = vrot.slane %v1239, 2
        %v1309 = vsel %vm573, %v1307, %v1308
        %v1310 = vrot.slane %v1240, 2
        %v1311 = vrot.slane %v1242, 2
        %v1312 = vsel %vm573, %v1310, %v1311
        %v1313 = vrot.slane %v1241, 2
        %v1314 = vrot.slane %v1243, 2
        %v1315 = vsel %vm573, %v1313, %v1314
        %v1316 = vrot.slane %v1244, 2
        %v1317 = vrot.slane %v1246, 2
        %v1318 = vsel %vm573, %v1316, %v1317
        %v1319 = vrot.slane %v1245, 2
        %v1320 = vrot.slane %v1247, 2
        %v1321 = vsel %vm573, %v1319, %v1320
        %v1322 = vrot.slane %v1248, 2
        %v1323 = vrot.slane %v1250, 2
        %v1324 = vsel %vm573, %v1322, %v1323
        %v1325 = vrot.slane %v1249, 2
        %v1326 = vrot.slane %v1251, 2
        %v1327 = vsel %vm573, %v1325, %v1326
        %v1328 = vrot.slane %v1252, 2
        %v1329 = vrot.slane %v1254, 2
        %v1330 = vsel %vm573, %v1328, %v1329
        %v1331 = vrot.slane %v1253, 2
        %v1332 = vrot.slane %v1255, 2
        %v1333 = vsel %vm573, %v1331, %v1332
        %v1334 = vrot.slane %v1256, 2
        %v1335 = vrot.slane %v1258, 2
        %v1336 = vsel %vm573, %v1334, %v1335
        %v1337 = vrot.slane %v1257, 2
        %v1338 = vrot.slane %v1259, 2
        %v1339 = vsel %vm573, %v1337, %v1338
        %v1356 = vadd.f32 %v1199, %v1294
        %v1357 = vadd.f32 %v1200, %v1297
        %v1358 = vadd.f32 %v1201, %v1300
        %v1359 = vadd.f32 %v1202, %v1303
        %v1360 = vadd.f32 %v1203, %v1306
        %v1361 = vadd.f32 %v1204, %v1309
        %v1362 = vadd.f32 %v1205, %v1312
        %v1363 = vadd.f32 %v1206, %v1315
        %v1364 = vadd.f32 %v1207, %v1318
        %v1365 = vadd.f32 %v1208, %v1321
        %v1366 = vadd.f32 %v1209, %v1324
        %v1367 = vadd.f32 %v1210, %v1327
        %v1368 = vadd.f32 %v1211, %v1330
        %v1369 = vadd.f32 %v1212, %v1333
        %v1370 = vadd.f32 %v1213, %v1336
        %v1371 = vadd.f32 %v1214, %v1339
        %s1372 = scalar_lea.vmem [#allocation5], 36
        %v1373 = vld [vmem:[%s1372] ss:$8 sm:$0x3]
        %s1374 = scalar_lea.vmem [#allocation5], 37
        %v1375 = vld [vmem:[%s1374] ss:$8 sm:$0x3]
        %s1376 = scalar_lea.vmem [#allocation5], 38
        %v1377 = vld [vmem:[%s1376] ss:$8 sm:$0x3]
        %s1378 = scalar_lea.vmem [#allocation5], 39
        %v1379 = vld [vmem:[%s1378] ss:$8 sm:$0x3]
        %v1380 = vadd.f32 %v1379, 1e-05
        %v1381 = vrsqrt.pop %v1380
        %v1382 = vmul.f32 %v1373, %v1381
        %v1384 = vlaneseq
        %v1385 = vshrl.u32 %v1384, 7
        %v1386 = vsub.s32 0, %v1385
        %v1387 = vrot.slane %v1377, %v1386
        %v1388 = vlaneseq
        %v1389 = vshrl.u32 %v1388, 7
        %v1390 = vsub.s32 1, %v1389
        %v1391 = vrot.slane %v1377, %v1390
        %v1394 = vsub.f32 %v1356, %v1387
        %v1395 = vsub.f32 %v1357, %v1391
        %v1396 = vsub.f32 %v1358, %v1387
        %v1397 = vsub.f32 %v1359, %v1391
        %v1398 = vsub.f32 %v1360, %v1387
        %v1399 = vsub.f32 %v1361, %v1391
        %v1400 = vsub.f32 %v1362, %v1387
        %v1401 = vsub.f32 %v1363, %v1391
        %v1402 = vsub.f32 %v1364, %v1387
        %v1403 = vsub.f32 %v1365, %v1391
        %v1404 = vsub.f32 %v1366, %v1387
        %v1405 = vsub.f32 %v1367, %v1391
        %v1406 = vsub.f32 %v1368, %v1387
        %v1407 = vsub.f32 %v1369, %v1391
        %v1408 = vsub.f32 %v1370, %v1387
        %v1409 = vsub.f32 %v1371, %v1391
        %v1411 = vlaneseq
        %v1412 = vshrl.u32 %v1411, 7
        %v1413 = vsub.s32 0, %v1412
        %v1414 = vrot.slane %v1382, %v1413
        %v1415 = vlaneseq
        %v1416 = vshrl.u32 %v1415, 7
        %v1417 = vsub.s32 1, %v1416
        %v1418 = vrot.slane %v1382, %v1417
        %v1421 = vmul.f32 %v1394, %v1414
        %v1422 = vmul.f32 %v1395, %v1418
        %v1423 = vmul.f32 %v1396, %v1414
        %v1424 = vmul.f32 %v1397, %v1418
        %v1425 = vmul.f32 %v1398, %v1414
        %v1426 = vmul.f32 %v1399, %v1418
        %v1427 = vmul.f32 %v1400, %v1414
        %v1428 = vmul.f32 %v1401, %v1418
        %v1429 = vmul.f32 %v1402, %v1414
        %v1430 = vmul.f32 %v1403, %v1418
        %v1431 = vmul.f32 %v1404, %v1414
        %v1432 = vmul.f32 %v1405, %v1418
        %v1433 = vmul.f32 %v1406, %v1414
        %v1434 = vmul.f32 %v1407, %v1418
        %v1435 = vmul.f32 %v1408, %v1414
        %v1436 = vmul.f32 %v1409, %v1418
        %v1438 = vlaneseq
        %v1439 = vshrl.u32 %v1438, 7
        %v1440 = vsub.s32 0, %v1439
        %v1441 = vrot.slane %v1375, %v1440
        %v1442 = vlaneseq
        %v1443 = vshrl.u32 %v1442, 7
        %v1444 = vsub.s32 1, %v1443
        %v1445 = vrot.slane %v1375, %v1444
        %v1448 = vadd.f32 %v1421, %v1441
        %v1449 = vadd.f32 %v1422, %v1445
        %v1450 = vadd.f32 %v1423, %v1441
        %v1451 = vadd.f32 %v1424, %v1445
        %v1452 = vadd.f32 %v1425, %v1441
        %v1453 = vadd.f32 %v1426, %v1445
        %v1454 = vadd.f32 %v1427, %v1441
        %v1455 = vadd.f32 %v1428, %v1445
        %v1456 = vadd.f32 %v1429, %v1441
        %v1457 = vadd.f32 %v1430, %v1445
        %v1458 = vadd.f32 %v1431, %v1441
        %v1459 = vadd.f32 %v1432, %v1445
        %v1460 = vadd.f32 %v1433, %v1441
        %v1461 = vadd.f32 %v1434, %v1445
        %v1462 = vadd.f32 %v1435, %v1441
        %v1463 = vadd.f32 %v1436, %v1445
        %v1464 = vmax.f32 %v1448, 0.0
        %v1465 = vmax.f32 %v1449, 0.0
        %v1466 = vmax.f32 %v1450, 0.0
        %v1467 = vmax.f32 %v1451, 0.0
        %v1468 = vmax.f32 %v1452, 0.0
        %v1469 = vmax.f32 %v1453, 0.0
        %v1470 = vmax.f32 %v1454, 0.0
        %v1471 = vmax.f32 %v1455, 0.0
        %v1472 = vmax.f32 %v1456, 0.0
        %v1473 = vmax.f32 %v1457, 0.0
        %v1474 = vmax.f32 %v1458, 0.0
        %v1475 = vmax.f32 %v1459, 0.0
        %v1476 = vmax.f32 %v1460, 0.0
        %v1477 = vmax.f32 %v1461, 0.0
        %v1478 = vmax.f32 %v1462, 0.0
        %v1479 = vmax.f32 %v1463, 0.0
        %v1496 = vrot.slane %v1464, 7
        %v1497 = vrot.slane %v1465, 7
        %v1498 = vrot.slane %v1466, 7
        %v1499 = vrot.slane %v1467, 7
        %v1500 = vrot.slane %v1468, 7
        %v1501 = vrot.slane %v1469, 7
        %v1502 = vrot.slane %v1470, 7
        %v1503 = vrot.slane %v1471, 7
        %v1504 = vrot.slane %v1472, 7
        %v1505 = vrot.slane %v1473, 7
        %v1506 = vrot.slane %v1474, 7
        %v1507 = vrot.slane %v1475, 7
        %v1508 = vrot.slane %v1476, 7
        %v1509 = vrot.slane %v1477, 7
        %v1510 = vrot.slane %v1478, 7
        %v1511 = vrot.slane %v1479, 7
        %v1528 = vsel %vm244, 0.0, %v1496
        %v1529 = vsel %vm244, 0.0, %v1497
        %v1530 = vsel %vm244, 0.0, %v1498
        %v1531 = vsel %vm244, 0.0, %v1499
        %v1532 = vsel %vm244, 0.0, %v1500
        %v1533 = vsel %vm244, 0.0, %v1501
        %v1534 = vsel %vm244, 0.0, %v1502
        %v1535 = vsel %vm244, 0.0, %v1503
        %v1536 = vsel %vm244, 0.0, %v1504
        %v1537 = vsel %vm244, 0.0, %v1505
        %v1538 = vsel %vm244, 0.0, %v1506
        %v1539 = vsel %vm244, 0.0, %v1507
        %v1540 = vsel %vm244, 0.0, %v1508
        %v1541 = vsel %vm244, 0.0, %v1509
        %v1542 = vsel %vm244, 0.0, %v1510
        %v1543 = vsel %vm244, 0.0, %v1511
        %v1544 = vsel %vm244, %v1496, 0.0
        %v1545 = vsel %vm244, %v1497, 0.0
        %v1546 = vsel %vm244, %v1498, 0.0
        %v1547 = vsel %vm244, %v1499, 0.0
        %v1548 = vsel %vm244, %v1500, 0.0
        %v1549 = vsel %vm244, %v1501, 0.0
        %v1550 = vsel %vm244, %v1502, 0.0
        %v1551 = vsel %vm244, %v1503, 0.0
        %v1552 = vsel %vm244, %v1504, 0.0
        %v1553 = vsel %vm244, %v1505, 0.0
        %v1554 = vsel %vm244, %v1506, 0.0
        %v1555 = vsel %vm244, %v1507, 0.0
        %v1556 = vsel %vm244, %v1508, 0.0
        %v1557 = vsel %vm244, %v1509, 0.0
        %v1558 = vsel %vm244, %v1510, 0.0
        %v1559 = vsel %vm244, %v1511, 0.0
        %s1560 = scalar_lea.vmem [#allocation5], 35
        %v1561 = vld [vmem:[%s1560] ss:$8 sm:$0x3]
        %v1563 = vlaneseq
        %v1564 = vshrl.u32 %v1563, 7
        %v1565 = vsub.s32 0, %v1564
        %v1566 = vrot.slane %v1561, %v1565
        %v1567 = vlaneseq
        %v1568 = vshrl.u32 %v1567, 7
        %v1569 = vsub.s32 1, %v1568
        %v1570 = vrot.slane %v1561, %v1569
        %v1573 = vadd.f32 %v1566, 0.0
        %v1574 = vadd.f32 %v1570, 0.0
        %s1575 = scalar_lea.vmem [#allocation5], 18
        %v1576 = vld [vmem:[%s1575] ss:$8 sm:$0x3]
        %v1578 = vlaneseq
        %v1579 = vshrl.u32 %v1578, 7
        %v1580 = vsub.s32 0, %v1579
        %v1581 = vrot.slane %v1576, %v1580
        %v1582 = vlaneseq
        %v1583 = vshrl.u32 %v1582, 7
        %v1584 = vsub.s32 1, %v1583
        %v1585 = vrot.slane %v1576, %v1584
        %v1588 = vmul.f32 %v245, %v1581
        %v1589 = vmul.f32 %v245, %v1585
        %v1590 = vmul.f32 %v1528, %v1581
        %v1591 = vmul.f32 %v1529, %v1585
        %v1592 = vmul.f32 %v1530, %v1581
        %v1593 = vmul.f32 %v1531, %v1585
        %v1594 = vmul.f32 %v1532, %v1581
        %v1595 = vmul.f32 %v1533, %v1585
        %v1596 = vmul.f32 %v1534, %v1581
        %v1597 = vmul.f32 %v1535, %v1585
        %v1598 = vmul.f32 %v1536, %v1581
        %v1599 = vmul.f32 %v1537, %v1585
        %v1600 = vmul.f32 %v1538, %v1581
        %v1601 = vmul.f32 %v1539, %v1585
        %v1602 = vmul.f32 %v1540, %v1581
        %v1603 = vmul.f32 %v1541, %v1585
        %v1604 = vadd.f32 %v1573, %v1588
        %v1605 = vadd.f32 %v1574, %v1589
        %v1606 = vadd.f32 %v1573, %v1590
        %v1607 = vadd.f32 %v1574, %v1591
        %v1608 = vadd.f32 %v1573, %v1592
        %v1609 = vadd.f32 %v1574, %v1593
        %v1610 = vadd.f32 %v1573, %v1594
        %v1611 = vadd.f32 %v1574, %v1595
        %v1612 = vadd.f32 %v1573, %v1596
        %v1613 = vadd.f32 %v1574, %v1597
        %v1614 = vadd.f32 %v1573, %v1598
        %v1615 = vadd.f32 %v1574, %v1599
        %v1616 = vadd.f32 %v1573, %v1600
        %v1617 = vadd.f32 %v1574, %v1601
        %v1618 = vadd.f32 %v1573, %v1602
        %v1619 = vadd.f32 %v1574, %v1603
        %s1620 = scalar_lea.vmem [#allocation5], 19
        %v1621 = vld [vmem:[%s1620] ss:$8 sm:$0x3]
        %v1623 = vlaneseq
        %v1624 = vshrl.u32 %v1623, 7
        %v1625 = vsub.s32 0, %v1624
        %v1626 = vrot.slane %v1621, %v1625
        %v1627 = vlaneseq
        %v1628 = vshrl.u32 %v1627, 7
        %v1629 = vsub.s32 1, %v1628
        %v1630 = vrot.slane %v1621, %v1629
        %v1633 = vmul.f32 %v245, %v1626
        %v1634 = vmul.f32 %v245, %v1630
        %v1635 = vmul.f32 %v262, %v1626
        %v1636 = vmul.f32 %v262, %v1630
        %v1637 = vmul.f32 %v1528, %v1626
        %v1638 = vmul.f32 %v1529, %v1630
        %v1639 = vmul.f32 %v1544, %v1626
        %v1640 = vmul.f32 %v1545, %v1630
        %v1641 = vmul.f32 %v1530, %v1626
        %v1642 = vmul.f32 %v1531, %v1630
        %v1643 = vmul.f32 %v1546, %v1626
        %v1644 = vmul.f32 %v1547, %v1630
        %v1645 = vmul.f32 %v1532, %v1626
        %v1646 = vmul.f32 %v1533, %v1630
        %v1647 = vmul.f32 %v1548, %v1626
        %v1648 = vmul.f32 %v1549, %v1630
        %v1649 = vmul.f32 %v1534, %v1626
        %v1650 = vmul.f32 %v1535, %v1630
        %v1651 = vmul.f32 %v1550, %v1626
        %v1652 = vmul.f32 %v1551, %v1630
        %v1653 = vmul.f32 %v1536, %v1626
        %v1654 = vmul.f32 %v1537, %v1630
        %v1655 = vmul.f32 %v1552, %v1626
        %v1656 = vmul.f32 %v1553, %v1630
        %v1657 = vmul.f32 %v1538, %v1626
        %v1658 = vmul.f32 %v1539, %v1630
        %v1659 = vmul.f32 %v1554, %v1626
        %v1660 = vmul.f32 %v1555, %v1630
        %v1661 = vmul.f32 %v1540, %v1626
        %v1662 = vmul.f32 %v1541, %v1630
        %v1663 = vmul.f32 %v1556, %v1626
        %v1664 = vmul.f32 %v1557, %v1630
        %v1697 = vrot.slane %v1633, 1
        %v1698 = vrot.slane %v1635, 1
        %v1699 = vsel %vm415, %v1697, %v1698
        %v1700 = vrot.slane %v1634, 1
        %v1701 = vrot.slane %v1636, 1
        %v1702 = vsel %vm415, %v1700, %v1701
        %v1703 = vrot.slane %v1637, 1
        %v1704 = vrot.slane %v1639, 1
        %v1705 = vsel %vm415, %v1703, %v1704
        %v1706 = vrot.slane %v1638, 1
        %v1707 = vrot.slane %v1640, 1
        %v1708 = vsel %vm415, %v1706, %v1707
        %v1709 = vrot.slane %v1641, 1
        %v1710 = vrot.slane %v1643, 1
        %v1711 = vsel %vm415, %v1709, %v1710
        %v1712 = vrot.slane %v1642, 1
        %v1713 = vrot.slane %v1644, 1
        %v1714 = vsel %vm415, %v1712, %v1713
        %v1715 = vrot.slane %v1645, 1
        %v1716 = vrot.slane %v1647, 1
        %v1717 = vsel %vm415, %v1715, %v1716
        %v1718 = vrot.slane %v1646, 1
        %v1719 = vrot.slane %v1648, 1
        %v1720 = vsel %vm415, %v1718, %v1719
        %v1721 = vrot.slane %v1649, 1
        %v1722 = vrot.slane %v1651, 1
        %v1723 = vsel %vm415, %v1721, %v1722
        %v1724 = vrot.slane %v1650, 1
        %v1725 = vrot.slane %v1652, 1
        %v1726 = vsel %vm415, %v1724, %v1725
        %v1727 = vrot.slane %v1653, 1
        %v1728 = vrot.slane %v1655, 1
        %v1729 = vsel %vm415, %v1727, %v1728
        %v1730 = vrot.slane %v1654, 1
        %v1731 = vrot.slane %v1656, 1
        %v1732 = vsel %vm415, %v1730, %v1731
        %v1733 = vrot.slane %v1657, 1
        %v1734 = vrot.slane %v1659, 1
        %v1735 = vsel %vm415, %v1733, %v1734
        %v1736 = vrot.slane %v1658, 1
        %v1737 = vrot.slane %v1660, 1
        %v1738 = vsel %vm415, %v1736, %v1737
        %v1739 = vrot.slane %v1661, 1
        %v1740 = vrot.slane %v1663, 1
        %v1741 = vsel %vm415, %v1739, %v1740
        %v1742 = vrot.slane %v1662, 1
        %v1743 = vrot.slane %v1664, 1
        %v1744 = vsel %vm415, %v1742, %v1743
        %v1761 = vadd.f32 %v1604, %v1699
        %v1762 = vadd.f32 %v1605, %v1702
        %v1763 = vadd.f32 %v1606, %v1705
        %v1764 = vadd.f32 %v1607, %v1708
        %v1765 = vadd.f32 %v1608, %v1711
        %v1766 = vadd.f32 %v1609, %v1714
        %v1767 = vadd.f32 %v1610, %v1717
        %v1768 = vadd.f32 %v1611, %v1720
        %v1769 = vadd.f32 %v1612, %v1723
        %v1770 = vadd.f32 %v1613, %v1726
        %v1771 = vadd.f32 %v1614, %v1729
        %v1772 = vadd.f32 %v1615, %v1732
        %v1773 = vadd.f32 %v1616, %v1735
        %v1774 = vadd.f32 %v1617, %v1738
        %v1775 = vadd.f32 %v1618, %v1741
        %v1776 = vadd.f32 %v1619, %v1744
        %s1777 = scalar_lea.vmem [#allocation5], 20
        %v1778 = vld [vmem:[%s1777] ss:$8 sm:$0x3]
        %v1780 = vlaneseq
        %v1781 = vshrl.u32 %v1780, 7
        %v1782 = vsub.s32 0, %v1781
        %v1783 = vrot.slane %v1778, %v1782
        %v1784 = vlaneseq
        %v1785 = vshrl.u32 %v1784, 7
        %v1786 = vsub.s32 1, %v1785
        %v1787 = vrot.slane %v1778, %v1786
        %v1790 = vmul.f32 %v245, %v1783
        %v1791 = vmul.f32 %v245, %v1787
        %v1792 = vmul.f32 %v262, %v1783
        %v1793 = vmul.f32 %v262, %v1787
        %v1794 = vmul.f32 %v1528, %v1783
        %v1795 = vmul.f32 %v1529, %v1787
        %v1796 = vmul.f32 %v1544, %v1783
        %v1797 = vmul.f32 %v1545, %v1787
        %v1798 = vmul.f32 %v1530, %v1783
        %v1799 = vmul.f32 %v1531, %v1787
        %v1800 = vmul.f32 %v1546, %v1783
        %v1801 = vmul.f32 %v1547, %v1787
        %v1802 = vmul.f32 %v1532, %v1783
        %v1803 = vmul.f32 %v1533, %v1787
        %v1804 = vmul.f32 %v1548, %v1783
        %v1805 = vmul.f32 %v1549, %v1787
        %v1806 = vmul.f32 %v1534, %v1783
        %v1807 = vmul.f32 %v1535, %v1787
        %v1808 = vmul.f32 %v1550, %v1783
        %v1809 = vmul.f32 %v1551, %v1787
        %v1810 = vmul.f32 %v1536, %v1783
        %v1811 = vmul.f32 %v1537, %v1787
        %v1812 = vmul.f32 %v1552, %v1783
        %v1813 = vmul.f32 %v1553, %v1787
        %v1814 = vmul.f32 %v1538, %v1783
        %v1815 = vmul.f32 %v1539, %v1787
        %v1816 = vmul.f32 %v1554, %v1783
        %v1817 = vmul.f32 %v1555, %v1787
        %v1818 = vmul.f32 %v1540, %v1783
        %v1819 = vmul.f32 %v1541, %v1787
        %v1820 = vmul.f32 %v1556, %v1783
        %v1821 = vmul.f32 %v1557, %v1787
        %v1854 = vrot.slane %v1790, 2
        %v1855 = vrot.slane %v1792, 2
        %v1856 = vsel %vm573, %v1854, %v1855
        %v1857 = vrot.slane %v1791, 2
        %v1858 = vrot.slane %v1793, 2
        %v1859 = vsel %vm573, %v1857, %v1858
        %v1860 = vrot.slane %v1794, 2
        %v1861 = vrot.slane %v1796, 2
        %v1862 = vsel %vm573, %v1860, %v1861
        %v1863 = vrot.slane %v1795, 2
        %v1864 = vrot.slane %v1797, 2
        %v1865 = vsel %vm573, %v1863, %v1864
        %v1866 = vrot.slane %v1798, 2
        %v1867 = vrot.slane %v1800, 2
        %v1868 = vsel %vm573, %v1866, %v1867
        %v1869 = vrot.slane %v1799, 2
        %v1870 = vrot.slane %v1801, 2
        %v1871 = vsel %vm573, %v1869, %v1870
        %v1872 = vrot.slane %v1802, 2
        %v1873 = vrot.slane %v1804, 2
        %v1874 = vsel %vm573, %v1872, %v1873
        %v1875 = vrot.slane %v1803, 2
        %v1876 = vrot.slane %v1805, 2
        %v1877 = vsel %vm573, %v1875, %v1876
        %v1878 = vrot.slane %v1806, 2
        %v1879 = vrot.slane %v1808, 2
        %v1880 = vsel %vm573, %v1878, %v1879
        %v1881 = vrot.slane %v1807, 2
        %v1882 = vrot.slane %v1809, 2
        %v1883 = vsel %vm573, %v1881, %v1882
        %v1884 = vrot.slane %v1810, 2
        %v1885 = vrot.slane %v1812, 2
        %v1886 = vsel %vm573, %v1884, %v1885
        %v1887 = vrot.slane %v1811, 2
        %v1888 = vrot.slane %v1813, 2
        %v1889 = vsel %vm573, %v1887, %v1888
        %v1890 = vrot.slane %v1814, 2
        %v1891 = vrot.slane %v1816, 2
        %v1892 = vsel %vm573, %v1890, %v1891
        %v1893 = vrot.slane %v1815, 2
        %v1894 = vrot.slane %v1817, 2
        %v1895 = vsel %vm573, %v1893, %v1894
        %v1896 = vrot.slane %v1818, 2
        %v1897 = vrot.slane %v1820, 2
        %v1898 = vsel %vm573, %v1896, %v1897
        %v1899 = vrot.slane %v1819, 2
        %v1900 = vrot.slane %v1821, 2
        %v1901 = vsel %vm573, %v1899, %v1900
        %v1918 = vadd.f32 %v1761, %v1856
        %v1919 = vadd.f32 %v1762, %v1859
        %v1920 = vadd.f32 %v1763, %v1862
        %v1921 = vadd.f32 %v1764, %v1865
        %v1922 = vadd.f32 %v1765, %v1868
        %v1923 = vadd.f32 %v1766, %v1871
        %v1924 = vadd.f32 %v1767, %v1874
        %v1925 = vadd.f32 %v1768, %v1877
        %v1926 = vadd.f32 %v1769, %v1880
        %v1927 = vadd.f32 %v1770, %v1883
        %v1928 = vadd.f32 %v1771, %v1886
        %v1929 = vadd.f32 %v1772, %v1889
        %v1930 = vadd.f32 %v1773, %v1892
        %v1931 = vadd.f32 %v1774, %v1895
        %v1932 = vadd.f32 %v1775, %v1898
        %v1933 = vadd.f32 %v1776, %v1901
        %s1934 = scalar_lea.vmem [#allocation5], 21
        %v1935 = vld [vmem:[%s1934] ss:$8 sm:$0x3]
        %v1937 = vlaneseq
        %v1938 = vshrl.u32 %v1937, 7
        %v1939 = vsub.s32 0, %v1938
        %v1940 = vrot.slane %v1935, %v1939
        %v1941 = vlaneseq
        %v1942 = vshrl.u32 %v1941, 7
        %v1943 = vsub.s32 1, %v1942
        %v1944 = vrot.slane %v1935, %v1943
        %v1947 = vmul.f32 %v1528, %v1940
        %v1948 = vmul.f32 %v1529, %v1944
        %v1949 = vmul.f32 %v1530, %v1940
        %v1950 = vmul.f32 %v1531, %v1944
        %v1951 = vmul.f32 %v1532, %v1940
        %v1952 = vmul.f32 %v1533, %v1944
        %v1953 = vmul.f32 %v1534, %v1940
        %v1954 = vmul.f32 %v1535, %v1944
        %v1955 = vmul.f32 %v1536, %v1940
        %v1956 = vmul.f32 %v1537, %v1944
        %v1957 = vmul.f32 %v1538, %v1940
        %v1958 = vmul.f32 %v1539, %v1944
        %v1959 = vmul.f32 %v1540, %v1940
        %v1960 = vmul.f32 %v1541, %v1944
        %v1961 = vmul.f32 %v1542, %v1940
        %v1962 = vmul.f32 %v1543, %v1944
        %v1963 = vadd.f32 %v1918, %v1947
        %v1964 = vadd.f32 %v1919, %v1948
        %v1965 = vadd.f32 %v1920, %v1949
        %v1966 = vadd.f32 %v1921, %v1950
        %v1967 = vadd.f32 %v1922, %v1951
        %v1968 = vadd.f32 %v1923, %v1952
        %v1969 = vadd.f32 %v1924, %v1953
        %v1970 = vadd.f32 %v1925, %v1954
        %v1971 = vadd.f32 %v1926, %v1955
        %v1972 = vadd.f32 %v1927, %v1956
        %v1973 = vadd.f32 %v1928, %v1957
        %v1974 = vadd.f32 %v1929, %v1958
        %v1975 = vadd.f32 %v1930, %v1959
        %v1976 = vadd.f32 %v1931, %v1960
        %v1977 = vadd.f32 %v1932, %v1961
        %v1978 = vadd.f32 %v1933, %v1962
        %s1979 = scalar_lea.vmem [#allocation5], 22
        %v1980 = vld [vmem:[%s1979] ss:$8 sm:$0x3]
        %v1982 = vlaneseq
        %v1983 = vshrl.u32 %v1982, 7
        %v1984 = vsub.s32 0, %v1983
        %v1985 = vrot.slane %v1980, %v1984
        %v1986 = vlaneseq
        %v1987 = vshrl.u32 %v1986, 7
        %v1988 = vsub.s32 1, %v1987
        %v1989 = vrot.slane %v1980, %v1988
        %v1992 = vmul.f32 %v1528, %v1985
        %v1993 = vmul.f32 %v1529, %v1989
        %v1994 = vmul.f32 %v1544, %v1985
        %v1995 = vmul.f32 %v1545, %v1989
        %v1996 = vmul.f32 %v1530, %v1985
        %v1997 = vmul.f32 %v1531, %v1989
        %v1998 = vmul.f32 %v1546, %v1985
        %v1999 = vmul.f32 %v1547, %v1989
        %v2000 = vmul.f32 %v1532, %v1985
        %v2001 = vmul.f32 %v1533, %v1989
        %v2002 = vmul.f32 %v1548, %v1985
        %v2003 = vmul.f32 %v1549, %v1989
        %v2004 = vmul.f32 %v1534, %v1985
        %v2005 = vmul.f32 %v1535, %v1989
        %v2006 = vmul.f32 %v1550, %v1985
        %v2007 = vmul.f32 %v1551, %v1989
        %v2008 = vmul.f32 %v1536, %v1985
        %v2009 = vmul.f32 %v1537, %v1989
        %v2010 = vmul.f32 %v1552, %v1985
        %v2011 = vmul.f32 %v1553, %v1989
        %v2012 = vmul.f32 %v1538, %v1985
        %v2013 = vmul.f32 %v1539, %v1989
        %v2014 = vmul.f32 %v1554, %v1985
        %v2015 = vmul.f32 %v1555, %v1989
        %v2016 = vmul.f32 %v1540, %v1985
        %v2017 = vmul.f32 %v1541, %v1989
        %v2018 = vmul.f32 %v1556, %v1985
        %v2019 = vmul.f32 %v1557, %v1989
        %v2020 = vmul.f32 %v1542, %v1985
        %v2021 = vmul.f32 %v1543, %v1989
        %v2022 = vmul.f32 %v1558, %v1985
        %v2023 = vmul.f32 %v1559, %v1989
        %v2056 = vrot.slane %v1992, 1
        %v2057 = vrot.slane %v1994, 1
        %v2058 = vsel %vm415, %v2056, %v2057
        %v2059 = vrot.slane %v1993, 1
        %v2060 = vrot.slane %v1995, 1
        %v2061 = vsel %vm415, %v2059, %v2060
        %v2062 = vrot.slane %v1996, 1
        %v2063 = vrot.slane %v1998, 1
        %v2064 = vsel %vm415, %v2062, %v2063
        %v2065 = vrot.slane %v1997, 1
        %v2066 = vrot.slane %v1999, 1
        %v2067 = vsel %vm415, %v2065, %v2066
        %v2068 = vrot.slane %v2000, 1
        %v2069 = vrot.slane %v2002, 1
        %v2070 = vsel %vm415, %v2068, %v2069
        %v2071 = vrot.slane %v2001, 1
        %v2072 = vrot.slane %v2003, 1
        %v2073 = vsel %vm415, %v2071, %v2072
        %v2074 = vrot.slane %v2004, 1
        %v2075 = vrot.slane %v2006, 1
        %v2076 = vsel %vm415, %v2074, %v2075
        %v2077 = vrot.slane %v2005, 1
        %v2078 = vrot.slane %v2007, 1
        %v2079 = vsel %vm415, %v2077, %v2078
        %v2080 = vrot.slane %v2008, 1
        %v2081 = vrot.slane %v2010, 1
        %v2082 = vsel %vm415, %v2080, %v2081
        %v2083 = vrot.slane %v2009, 1
        %v2084 = vrot.slane %v2011, 1
        %v2085 = vsel %vm415, %v2083, %v2084
        %v2086 = vrot.slane %v2012, 1
        %v2087 = vrot.slane %v2014, 1
        %v2088 = vsel %vm415, %v2086, %v2087
        %v2089 = vrot.slane %v2013, 1
        %v2090 = vrot.slane %v2015, 1
        %v2091 = vsel %vm415, %v2089, %v2090
        %v2092 = vrot.slane %v2016, 1
        %v2093 = vrot.slane %v2018, 1
        %v2094 = vsel %vm415, %v2092, %v2093
        %v2095 = vrot.slane %v2017, 1
        %v2096 = vrot.slane %v2019, 1
        %v2097 = vsel %vm415, %v2095, %v2096
        %v2098 = vrot.slane %v2020, 1
        %v2099 = vrot.slane %v2022, 1
        %v2100 = vsel %vm415, %v2098, %v2099
        %v2101 = vrot.slane %v2021, 1
        %v2102 = vrot.slane %v2023, 1
        %v2103 = vsel %vm415, %v2101, %v2102
        %v2120 = vadd.f32 %v1963, %v2058
        %v2121 = vadd.f32 %v1964, %v2061
        %v2122 = vadd.f32 %v1965, %v2064
        %v2123 = vadd.f32 %v1966, %v2067
        %v2124 = vadd.f32 %v1967, %v2070
        %v2125 = vadd.f32 %v1968, %v2073
        %v2126 = vadd.f32 %v1969, %v2076
        %v2127 = vadd.f32 %v1970, %v2079
        %v2128 = vadd.f32 %v1971, %v2082
        %v2129 = vadd.f32 %v1972, %v2085
        %v2130 = vadd.f32 %v1973, %v2088
        %v2131 = vadd.f32 %v1974, %v2091
        %v2132 = vadd.f32 %v1975, %v2094
        %v2133 = vadd.f32 %v1976, %v2097
        %v2134 = vadd.f32 %v1977, %v2100
        %v2135 = vadd.f32 %v1978, %v2103
        %s2136 = scalar_lea.vmem [#allocation5], 23
        %v2137 = vld [vmem:[%s2136] ss:$8 sm:$0x3]
        %v2139 = vlaneseq
        %v2140 = vshrl.u32 %v2139, 7
        %v2141 = vsub.s32 0, %v2140
        %v2142 = vrot.slane %v2137, %v2141
        %v2143 = vlaneseq
        %v2144 = vshrl.u32 %v2143, 7
        %v2145 = vsub.s32 1, %v2144
        %v2146 = vrot.slane %v2137, %v2145
        %v2149 = vmul.f32 %v1528, %v2142
        %v2150 = vmul.f32 %v1529, %v2146
        %v2151 = vmul.f32 %v1544, %v2142
        %v2152 = vmul.f32 %v1545, %v2146
        %v2153 = vmul.f32 %v1530, %v2142
        %v2154 = vmul.f32 %v1531, %v2146
        %v2155 = vmul.f32 %v1546, %v2142
        %v2156 = vmul.f32 %v1547, %v2146
        %v2157 = vmul.f32 %v1532, %v2142
        %v2158 = vmul.f32 %v1533, %v2146
        %v2159 = vmul.f32 %v1548, %v2142
        %v2160 = vmul.f32 %v1549, %v2146
        %v2161 = vmul.f32 %v1534, %v2142
        %v2162 = vmul.f32 %v1535, %v2146
        %v2163 = vmul.f32 %v1550, %v2142
        %v2164 = vmul.f32 %v1551, %v2146
        %v2165 = vmul.f32 %v1536, %v2142
        %v2166 = vmul.f32 %v1537, %v2146
        %v2167 = vmul.f32 %v1552, %v2142
        %v2168 = vmul.f32 %v1553, %v2146
        %v2169 = vmul.f32 %v1538, %v2142
        %v2170 = vmul.f32 %v1539, %v2146
        %v2171 = vmul.f32 %v1554, %v2142
        %v2172 = vmul.f32 %v1555, %v2146
        %v2173 = vmul.f32 %v1540, %v2142
        %v2174 = vmul.f32 %v1541, %v2146
        %v2175 = vmul.f32 %v1556, %v2142
        %v2176 = vmul.f32 %v1557, %v2146
        %v2177 = vmul.f32 %v1542, %v2142
        %v2178 = vmul.f32 %v1543, %v2146
        %v2179 = vmul.f32 %v1558, %v2142
        %v2180 = vmul.f32 %v1559, %v2146
        %v2213 = vrot.slane %v2149, 2
        %v2214 = vrot.slane %v2151, 2
        %v2215 = vsel %vm573, %v2213, %v2214
        %v2216 = vrot.slane %v2150, 2
        %v2217 = vrot.slane %v2152, 2
        %v2218 = vsel %vm573, %v2216, %v2217
        %v2219 = vrot.slane %v2153, 2
        %v2220 = vrot.slane %v2155, 2
        %v2221 = vsel %vm573, %v2219, %v2220
        %v2222 = vrot.slane %v2154, 2
        %v2223 = vrot.slane %v2156, 2
        %v2224 = vsel %vm573, %v2222, %v2223
        %v2225 = vrot.slane %v2157, 2
        %v2226 = vrot.slane %v2159, 2
        %v2227 = vsel %vm573, %v2225, %v2226
        %v2228 = vrot.slane %v2158, 2
        %v2229 = vrot.slane %v2160, 2
        %v2230 = vsel %vm573, %v2228, %v2229
        %v2231 = vrot.slane %v2161, 2
        %v2232 = vrot.slane %v2163, 2
        %v2233 = vsel %vm573, %v2231, %v2232
        %v2234 = vrot.slane %v2162, 2
        %v2235 = vrot.slane %v2164, 2
        %v2236 = vsel %vm573, %v2234, %v2235
        %v2237 = vrot.slane %v2165, 2
        %v2238 = vrot.slane %v2167, 2
        %v2239 = vsel %vm573, %v2237, %v2238
        %v2240 = vrot.slane %v2166, 2
        %v2241 = vrot.slane %v2168, 2
        %v2242 = vsel %vm573, %v2240, %v2241
        %v2243 = vrot.slane %v2169, 2
        %v2244 = vrot.slane %v2171, 2
        %v2245 = vsel %vm573, %v2243, %v2244
        %v2246 = vrot.slane %v2170, 2
        %v2247 = vrot.slane %v2172, 2
        %v2248 = vsel %vm573, %v2246, %v2247
        %v2249 = vrot.slane %v2173, 2
        %v2250 = vrot.slane %v2175, 2
        %v2251 = vsel %vm573, %v2249, %v2250
        %v2252 = vrot.slane %v2174, 2
        %v2253 = vrot.slane %v2176, 2
        %v2254 = vsel %vm573, %v2252, %v2253
        %v2255 = vrot.slane %v2177, 2
        %v2256 = vrot.slane %v2179, 2
        %v2257 = vsel %vm573, %v2255, %v2256
        %v2258 = vrot.slane %v2178, 2
        %v2259 = vrot.slane %v2180, 2
        %v2260 = vsel %vm573, %v2258, %v2259
        %v2277 = vadd.f32 %v2120, %v2215
        %v2278 = vadd.f32 %v2121, %v2218
        %v2279 = vadd.f32 %v2122, %v2221
        %v2280 = vadd.f32 %v2123, %v2224
        %v2281 = vadd.f32 %v2124, %v2227
        %v2282 = vadd.f32 %v2125, %v2230
        %v2283 = vadd.f32 %v2126, %v2233
        %v2284 = vadd.f32 %v2127, %v2236
        %v2285 = vadd.f32 %v2128, %v2239
        %v2286 = vadd.f32 %v2129, %v2242
        %v2287 = vadd.f32 %v2130, %v2245
        %v2288 = vadd.f32 %v2131, %v2248
        %v2289 = vadd.f32 %v2132, %v2251
        %v2290 = vadd.f32 %v2133, %v2254
        %v2291 = vadd.f32 %v2134, %v2257
        %v2292 = vadd.f32 %v2135, %v2260
        %s2293 = scalar_lea.vmem [#allocation5], 32
        %v2294 = vld [vmem:[%s2293] ss:$8 sm:$0x3]
        %v2296 = vlaneseq
        %v2297 = vshrl.u32 %v2296, 7
        %v2298 = vsub.s32 0, %v2297
        %v2299 = vrot.slane %v2294, %v2298
        %v2300 = vlaneseq
        %v2301 = vshrl.u32 %v2300, 7
        %v2302 = vsub.s32 1, %v2301
        %v2303 = vrot.slane %v2294, %v2302
        %v2306 = vmul.f32 %v1530, %v2299
        %v2307 = vmul.f32 %v1531, %v2303
        %v2308 = vmul.f32 %v1532, %v2299
        %v2309 = vmul.f32 %v1533, %v2303
        %v2310 = vmul.f32 %v1534, %v2299
        %v2311 = vmul.f32 %v1535, %v2303
        %v2312 = vmul.f32 %v1536, %v2299
        %v2313 = vmul.f32 %v1537, %v2303
        %v2314 = vmul.f32 %v1538, %v2299
        %v2315 = vmul.f32 %v1539, %v2303
        %v2316 = vmul.f32 %v1540, %v2299
        %v2317 = vmul.f32 %v1541, %v2303
        %v2318 = vmul.f32 %v1542, %v2299
        %v2319 = vmul.f32 %v1543, %v2303
        %v2320 = vmul.f32 %v245, %v2299
        %v2321 = vmul.f32 %v245, %v2303
        %v2322 = vadd.f32 %v2277, %v2306
        %v2323 = vadd.f32 %v2278, %v2307
        %v2324 = vadd.f32 %v2279, %v2308
        %v2325 = vadd.f32 %v2280, %v2309
        %v2326 = vadd.f32 %v2281, %v2310
        %v2327 = vadd.f32 %v2282, %v2311
        %v2328 = vadd.f32 %v2283, %v2312
        %v2329 = vadd.f32 %v2284, %v2313
        %v2330 = vadd.f32 %v2285, %v2314
        %v2331 = vadd.f32 %v2286, %v2315
        %v2332 = vadd.f32 %v2287, %v2316
        %v2333 = vadd.f32 %v2288, %v2317
        %v2334 = vadd.f32 %v2289, %v2318
        %v2335 = vadd.f32 %v2290, %v2319
        %v2336 = vadd.f32 %v2291, %v2320
        %v2337 = vadd.f32 %v2292, %v2321
        %s2338 = scalar_lea.vmem [#allocation5], 33
        %v2339 = vld [vmem:[%s2338] ss:$8 sm:$0x3]
        %v2341 = vlaneseq
        %v2342 = vshrl.u32 %v2341, 7
        %v2343 = vsub.s32 0, %v2342
        %v2344 = vrot.slane %v2339, %v2343
        %v2345 = vlaneseq
        %v2346 = vshrl.u32 %v2345, 7
        %v2347 = vsub.s32 1, %v2346
        %v2348 = vrot.slane %v2339, %v2347
        %v2351 = vmul.f32 %v1530, %v2344
        %v2352 = vmul.f32 %v1531, %v2348
        %v2353 = vmul.f32 %v1546, %v2344
        %v2354 = vmul.f32 %v1547, %v2348
        %v2355 = vmul.f32 %v1532, %v2344
        %v2356 = vmul.f32 %v1533, %v2348
        %v2357 = vmul.f32 %v1548, %v2344
        %v2358 = vmul.f32 %v1549, %v2348
        %v2359 = vmul.f32 %v1534, %v2344
        %v2360 = vmul.f32 %v1535, %v2348
        %v2361 = vmul.f32 %v1550, %v2344
        %v2362 = vmul.f32 %v1551, %v2348
        %v2363 = vmul.f32 %v1536, %v2344
        %v2364 = vmul.f32 %v1537, %v2348
        %v2365 = vmul.f32 %v1552, %v2344
        %v2366 = vmul.f32 %v1553, %v2348
        %v2367 = vmul.f32 %v1538, %v2344
        %v2368 = vmul.f32 %v1539, %v2348
        %v2369 = vmul.f32 %v1554, %v2344
        %v2370 = vmul.f32 %v1555, %v2348
        %v2371 = vmul.f32 %v1540, %v2344
        %v2372 = vmul.f32 %v1541, %v2348
        %v2373 = vmul.f32 %v1556, %v2344
        %v2374 = vmul.f32 %v1557, %v2348
        %v2375 = vmul.f32 %v1542, %v2344
        %v2376 = vmul.f32 %v1543, %v2348
        %v2377 = vmul.f32 %v1558, %v2344
        %v2378 = vmul.f32 %v1559, %v2348
        %v2379 = vmul.f32 %v245, %v2344
        %v2380 = vmul.f32 %v245, %v2348
        %v2381 = vmul.f32 %v262, %v2344
        %v2382 = vmul.f32 %v262, %v2348
        %v2415 = vrot.slane %v2351, 1
        %v2416 = vrot.slane %v2353, 1
        %v2417 = vsel %vm415, %v2415, %v2416
        %v2418 = vrot.slane %v2352, 1
        %v2419 = vrot.slane %v2354, 1
        %v2420 = vsel %vm415, %v2418, %v2419
        %v2421 = vrot.slane %v2355, 1
        %v2422 = vrot.slane %v2357, 1
        %v2423 = vsel %vm415, %v2421, %v2422
        %v2424 = vrot.slane %v2356, 1
        %v2425 = vrot.slane %v2358, 1
        %v2426 = vsel %vm415, %v2424, %v2425
        %v2427 = vrot.slane %v2359, 1
        %v2428 = vrot.slane %v2361, 1
        %v2429 = vsel %vm415, %v2427, %v2428
        %v2430 = vrot.slane %v2360, 1
        %v2431 = vrot.slane %v2362, 1
        %v2432 = vsel %vm415, %v2430, %v2431
        %v2433 = vrot.slane %v2363, 1
        %v2434 = vrot.slane %v2365, 1
        %v2435 = vsel %vm415, %v2433, %v2434
        %v2436 = vrot.slane %v2364, 1
        %v2437 = vrot.slane %v2366, 1
        %v2438 = vsel %vm415, %v2436, %v2437
        %v2439 = vrot.slane %v2367, 1
        %v2440 = vrot.slane %v2369, 1
        %v2441 = vsel %vm415, %v2439, %v2440
        %v2442 = vrot.slane %v2368, 1
        %v2443 = vrot.slane %v2370, 1
        %v2444 = vsel %vm415, %v2442, %v2443
        %v2445 = vrot.slane %v2371, 1
        %v2446 = vrot.slane %v2373, 1
        %v2447 = vsel %vm415, %v2445, %v2446
        %v2448 = vrot.slane %v2372, 1
        %v2449 = vrot.slane %v2374, 1
        %v2450 = vsel %vm415, %v2448, %v2449
        %v2451 = vrot.slane %v2375, 1
        %v2452 = vrot.slane %v2377, 1
        %v2453 = vsel %vm415, %v2451, %v2452
        %v2454 = vrot.slane %v2376, 1
        %v2455 = vrot.slane %v2378, 1
        %v2456 = vsel %vm415, %v2454, %v2455
        %v2457 = vrot.slane %v2379, 1
        %v2458 = vrot.slane %v2381, 1
        %v2459 = vsel %vm415, %v2457, %v2458
        %v2460 = vrot.slane %v2380, 1
        %v2461 = vrot.slane %v2382, 1
        %v2462 = vsel %vm415, %v2460, %v2461
        %v2479 = vadd.f32 %v2322, %v2417
        %v2480 = vadd.f32 %v2323, %v2420
        %v2481 = vadd.f32 %v2324, %v2423
        %v2482 = vadd.f32 %v2325, %v2426
        %v2483 = vadd.f32 %v2326, %v2429
        %v2484 = vadd.f32 %v2327, %v2432
        %v2485 = vadd.f32 %v2328, %v2435
        %v2486 = vadd.f32 %v2329, %v2438
        %v2487 = vadd.f32 %v2330, %v2441
        %v2488 = vadd.f32 %v2331, %v2444
        %v2489 = vadd.f32 %v2332, %v2447
        %v2490 = vadd.f32 %v2333, %v2450
        %v2491 = vadd.f32 %v2334, %v2453
        %v2492 = vadd.f32 %v2335, %v2456
        %v2493 = vadd.f32 %v2336, %v2459
        %v2494 = vadd.f32 %v2337, %v2462
        %s2495 = scalar_lea.vmem [#allocation5], 34
        %v2496 = vld [vmem:[%s2495] ss:$8 sm:$0x3]
        %v2498 = vlaneseq
        %v2499 = vshrl.u32 %v2498, 7
        %v2500 = vsub.s32 0, %v2499
        %v2501 = vrot.slane %v2496, %v2500
        %v2502 = vlaneseq
        %v2503 = vshrl.u32 %v2502, 7
        %v2504 = vsub.s32 1, %v2503
        %v2505 = vrot.slane %v2496, %v2504
        %v2508 = vmul.f32 %v1530, %v2501
        %v2509 = vmul.f32 %v1531, %v2505
        %v2510 = vmul.f32 %v1546, %v2501
        %v2511 = vmul.f32 %v1547, %v2505
        %v2512 = vmul.f32 %v1532, %v2501
        %v2513 = vmul.f32 %v1533, %v2505
        %v2514 = vmul.f32 %v1548, %v2501
        %v2515 = vmul.f32 %v1549, %v2505
        %v2516 = vmul.f32 %v1534, %v2501
        %v2517 = vmul.f32 %v1535, %v2505
        %v2518 = vmul.f32 %v1550, %v2501
        %v2519 = vmul.f32 %v1551, %v2505
        %v2520 = vmul.f32 %v1536, %v2501
        %v2521 = vmul.f32 %v1537, %v2505
        %v2522 = vmul.f32 %v1552, %v2501
        %v2523 = vmul.f32 %v1553, %v2505
        %v2524 = vmul.f32 %v1538, %v2501
        %v2525 = vmul.f32 %v1539, %v2505
        %v2526 = vmul.f32 %v1554, %v2501
        %v2527 = vmul.f32 %v1555, %v2505
        %v2528 = vmul.f32 %v1540, %v2501
        %v2529 = vmul.f32 %v1541, %v2505
        %v2530 = vmul.f32 %v1556, %v2501
        %v2531 = vmul.f32 %v1557, %v2505
        %v2532 = vmul.f32 %v1542, %v2501
        %v2533 = vmul.f32 %v1543, %v2505
        %v2534 = vmul.f32 %v1558, %v2501
        %v2535 = vmul.f32 %v1559, %v2505
        %v2536 = vmul.f32 %v245, %v2501
        %v2537 = vmul.f32 %v245, %v2505
        %v2538 = vmul.f32 %v262, %v2501
        %v2539 = vmul.f32 %v262, %v2505
        %v2572 = vrot.slane %v2508, 2
        %v2573 = vrot.slane %v2510, 2
        %v2574 = vsel %vm573, %v2572, %v2573
        %v2575 = vrot.slane %v2509, 2
        %v2576 = vrot.slane %v2511, 2
        %v2577 = vsel %vm573, %v2575, %v2576
        %v2578 = vrot.slane %v2512, 2
        %v2579 = vrot.slane %v2514, 2
        %v2580 = vsel %vm573, %v2578, %v2579
        %v2581 = vrot.slane %v2513, 2
        %v2582 = vrot.slane %v2515, 2
        %v2583 = vsel %vm573, %v2581, %v2582
        %v2584 = vrot.slane %v2516, 2
        %v2585 = vrot.slane %v2518, 2
        %v2586 = vsel %vm573, %v2584, %v2585
        %v2587 = vrot.slane %v2517, 2
        %v2588 = vrot.slane %v2519, 2
        %v2589 = vsel %vm573, %v2587, %v2588
        %v2590 = vrot.slane %v2520, 2
        %v2591 = vrot.slane %v2522, 2
        %v2592 = vsel %vm573, %v2590, %v2591
        %v2593 = vrot.slane %v2521, 2
        %v2594 = vrot.slane %v2523, 2
        %v2595 = vsel %vm573, %v2593, %v2594
        %v2596 = vrot.slane %v2524, 2
        %v2597 = vrot.slane %v2526, 2
        %v2598 = vsel %vm573, %v2596, %v2597
        %v2599 = vrot.slane %v2525, 2
        %v2600 = vrot.slane %v2527, 2
        %v2601 = vsel %vm573, %v2599, %v2600
        %v2602 = vrot.slane %v2528, 2
        %v2603 = vrot.slane %v2530, 2
        %v2604 = vsel %vm573, %v2602, %v2603
        %v2605 = vrot.slane %v2529, 2
        %v2606 = vrot.slane %v2531, 2
        %v2607 = vsel %vm573, %v2605, %v2606
        %v2608 = vrot.slane %v2532, 2
        %v2609 = vrot.slane %v2534, 2
        %v2610 = vsel %vm573, %v2608, %v2609
        %v2611 = vrot.slane %v2533, 2
        %v2612 = vrot.slane %v2535, 2
        %v2613 = vsel %vm573, %v2611, %v2612
        %v2614 = vrot.slane %v2536, 2
        %v2615 = vrot.slane %v2538, 2
        %v2616 = vsel %vm573, %v2614, %v2615
        %v2617 = vrot.slane %v2537, 2
        %v2618 = vrot.slane %v2539, 2
        %v2619 = vsel %vm573, %v2617, %v2618
        %v2636 = vadd.f32 %v2479, %v2574
        %v2637 = vadd.f32 %v2480, %v2577
        %v2638 = vadd.f32 %v2481, %v2580
        %v2639 = vadd.f32 %v2482, %v2583
        %v2640 = vadd.f32 %v2483, %v2586
        %v2641 = vadd.f32 %v2484, %v2589
        %v2642 = vadd.f32 %v2485, %v2592
        %v2643 = vadd.f32 %v2486, %v2595
        %v2644 = vadd.f32 %v2487, %v2598
        %v2645 = vadd.f32 %v2488, %v2601
        %v2646 = vadd.f32 %v2489, %v2604
        %v2647 = vadd.f32 %v2490, %v2607
        %v2648 = vadd.f32 %v2491, %v2610
        %v2649 = vadd.f32 %v2492, %v2613
        %v2650 = vadd.f32 %v2493, %v2616
        %v2651 = vadd.f32 %v2494, %v2619
        %s2652 = scalar_lea.vmem [#allocation5], 48
        %v2653 = vld [vmem:[%s2652] ss:$8 sm:$0x3]
        %s2654 = scalar_lea.vmem [#allocation5], 49
        %v2655 = vld [vmem:[%s2654] ss:$8 sm:$0x3]
        %s2656 = scalar_lea.vmem [#allocation5], 50
        %v2657 = vld [vmem:[%s2656] ss:$8 sm:$0x3]
        %s2658 = scalar_lea.vmem [#allocation5], 51
        %v2659 = vld [vmem:[%s2658] ss:$8 sm:$0x3]
        %v2660 = vadd.f32 %v2659, 1e-05
        %v2661 = vrsqrt.pop %v2660
        %v2662 = vmul.f32 %v2653, %v2661
        %v2664 = vlaneseq
        %v2665 = vshrl.u32 %v2664, 7
        %v2666 = vsub.s32 0, %v2665
        %v2667 = vrot.slane %v2657, %v2666
        %v2668 = vlaneseq
        %v2669 = vshrl.u32 %v2668, 7
        %v2670 = vsub.s32 1, %v2669
        %v2671 = vrot.slane %v2657, %v2670
        %v2674 = vsub.f32 %v2636, %v2667
        %v2675 = vsub.f32 %v2637, %v2671
        %v2676 = vsub.f32 %v2638, %v2667
        %v2677 = vsub.f32 %v2639, %v2671
        %v2678 = vsub.f32 %v2640, %v2667
        %v2679 = vsub.f32 %v2641, %v2671
        %v2680 = vsub.f32 %v2642, %v2667
        %v2681 = vsub.f32 %v2643, %v2671
        %v2682 = vsub.f32 %v2644, %v2667
        %v2683 = vsub.f32 %v2645, %v2671
        %v2684 = vsub.f32 %v2646, %v2667
        %v2685 = vsub.f32 %v2647, %v2671
        %v2686 = vsub.f32 %v2648, %v2667
        %v2687 = vsub.f32 %v2649, %v2671
        %v2688 = vsub.f32 %v2650, %v2667
        %v2689 = vsub.f32 %v2651, %v2671
        %v2691 = vlaneseq
        %v2692 = vshrl.u32 %v2691, 7
        %v2693 = vsub.s32 0, %v2692
        %v2694 = vrot.slane %v2662, %v2693
        %v2695 = vlaneseq
        %v2696 = vshrl.u32 %v2695, 7
        %v2697 = vsub.s32 1, %v2696
        %v2698 = vrot.slane %v2662, %v2697
        %v2701 = vmul.f32 %v2674, %v2694
        %v2702 = vmul.f32 %v2675, %v2698
        %v2703 = vmul.f32 %v2676, %v2694
        %v2704 = vmul.f32 %v2677, %v2698
        %v2705 = vmul.f32 %v2678, %v2694
        %v2706 = vmul.f32 %v2679, %v2698
        %v2707 = vmul.f32 %v2680, %v2694
        %v2708 = vmul.f32 %v2681, %v2698
        %v2709 = vmul.f32 %v2682, %v2694
        %v2710 = vmul.f32 %v2683, %v2698
        %v2711 = vmul.f32 %v2684, %v2694
        %v2712 = vmul.f32 %v2685, %v2698
        %v2713 = vmul.f32 %v2686, %v2694
        %v2714 = vmul.f32 %v2687, %v2698
        %v2715 = vmul.f32 %v2688, %v2694
        %v2716 = vmul.f32 %v2689, %v2698
        %v2718 = vlaneseq
        %v2719 = vshrl.u32 %v2718, 7
        %v2720 = vsub.s32 0, %v2719
        %v2721 = vrot.slane %v2655, %v2720
        %v2722 = vlaneseq
        %v2723 = vshrl.u32 %v2722, 7
        %v2724 = vsub.s32 1, %v2723
        %v2725 = vrot.slane %v2655, %v2724
        %v2728 = vadd.f32 %v2701, %v2721
        %v2729 = vadd.f32 %v2702, %v2725
        %v2730 = vadd.f32 %v2703, %v2721
        %v2731 = vadd.f32 %v2704, %v2725
        %v2732 = vadd.f32 %v2705, %v2721
        %v2733 = vadd.f32 %v2706, %v2725
        %v2734 = vadd.f32 %v2707, %v2721
        %v2735 = vadd.f32 %v2708, %v2725
        %v2736 = vadd.f32 %v2709, %v2721
        %v2737 = vadd.f32 %v2710, %v2725
        %v2738 = vadd.f32 %v2711, %v2721
        %v2739 = vadd.f32 %v2712, %v2725
        %v2740 = vadd.f32 %v2713, %v2721
        %v2741 = vadd.f32 %v2714, %v2725
        %v2742 = vadd.f32 %v2715, %v2721
        %v2743 = vadd.f32 %v2716, %v2725
        %v2744 = vadd.f32 %v177, %v2728
        %v2745 = vadd.f32 %v178, %v2729
        %v2746 = vadd.f32 %v179, %v2730
        %v2747 = vadd.f32 %v180, %v2731
        %v2748 = vadd.f32 %v181, %v2732
        %v2749 = vadd.f32 %v182, %v2733
        %v2750 = vadd.f32 %v183, %v2734
        %v2751 = vadd.f32 %v184, %v2735
        %v2752 = vadd.f32 %v185, %v2736
        %v2753 = vadd.f32 %v186, %v2737
        %v2754 = vadd.f32 %v187, %v2738
        %v2755 = vadd.f32 %v188, %v2739
        %v2756 = vadd.f32 %v189, %v2740
        %v2757 = vadd.f32 %v190, %v2741
        %v2758 = vadd.f32 %v191, %v2742
        %v2759 = vadd.f32 %v192, %v2743
        %v2760 = vmax.f32 %v2744, 0.0
        %v2761 = vmax.f32 %v2745, 0.0
        %v2762 = vmax.f32 %v2746, 0.0
        %v2763 = vmax.f32 %v2747, 0.0
        %v2764 = vmax.f32 %v2748, 0.0
        %v2765 = vmax.f32 %v2749, 0.0
        %v2766 = vmax.f32 %v2750, 0.0
        %v2767 = vmax.f32 %v2751, 0.0
        %v2768 = vmax.f32 %v2752, 0.0
        %v2769 = vmax.f32 %v2753, 0.0
        %v2770 = vmax.f32 %v2754, 0.0
        %v2771 = vmax.f32 %v2755, 0.0
        %v2772 = vmax.f32 %v2756, 0.0
        %v2773 = vmax.f32 %v2757, 0.0
        %v2774 = vmax.f32 %v2758, 0.0
        %v2775 = vmax.f32 %v2759, 0.0
        %2776 = vst [vmem:[%s176] sm:$0xff] %v2760
        %2777 = vst [vmem:[%s176 + $0x8] sm:$0xff] %v2761
        %2778 = vst [vmem:[%s176 + $0x10] sm:$0xff] %v2762
        %2779 = vst [vmem:[%s176 + $0x18] sm:$0xff] %v2763
        %2780 = vst [vmem:[%s176 + $0x20] sm:$0xff] %v2764
        %2781 = vst [vmem:[%s176 + $0x28] sm:$0xff] %v2765
        %2782 = vst [vmem:[%s176 + $0x30] sm:$0xff] %v2766
        %2783 = vst [vmem:[%s176 + $0x38] sm:$0xff] %v2767
        %2784 = vst [vmem:[%s176 + $0x40] sm:$0xff] %v2768
        %2785 = vst [vmem:[%s176 + $0x48] sm:$0xff] %v2769
        %2786 = vst [vmem:[%s176 + $0x50] sm:$0xff] %v2770
        %2787 = vst [vmem:[%s176 + $0x58] sm:$0xff] %v2771
        %2788 = vst [vmem:[%s176 + $0x60] sm:$0xff] %v2772
        %2789 = vst [vmem:[%s176 + $0x68] sm:$0xff] %v2773
        %2790 = vst [vmem:[%s176 + $0x70] sm:$0xff] %v2774
        %2791 = vst [vmem:[%s176 + $0x78] sm:$0xff] %v2775
        %s2792 = sand.u32 %s75, 1
        %s2793 = scalar_lea.sflag [#allocation4], %s2792
        %s2794 = sand.u32 %s75, 1
        %s2795 = smul.addr %s2794, 128
        %s2796 = scalar_lea.vmem [#allocation7], %s2795
        // Predicated region
        $region37: #{tpu_custom_call.1} parent=27 // pred_check
          %p2797 = pneg %p85
        $region38: #{tpu_custom_call.1} parent=27 // pred_check_branch
          %2799 = sbr.rel (%p2797) target = $region40
        $region39: #{tpu_custom_call.1} parent=27 // pred_region
          %s2801 = ssub.s32 2048, 2048
          %2802 = vsyncadd %s2793, %s2801
          %s2803 = smul.addr %s20, 16
          %s2804 = smul.addr %s2803, 128
          %s2805 = scalar_lea.hbm %s2, %s2804
          %s2806 = sshll.u32 %s2796, 4
          %s2807 = int_to_ptr.vmem [resolvable:$true] %s2806
          %2812 = dma.vmem_to_hbm [thread:$0]  %s2807, 2048, %s2805, %s2793, 256, 256, 16
        $region40: #{tpu_custom_call.1} parent=27 // pred_fallthru
          _
      $region28: #{tpu_custom_call.1} parent=5 // pred_fallthru
        _
      %p2813 = scmp.le.s32.totalorder 2, %s15
      // Predicated region
      $region41: #{tpu_custom_call.1} parent=5 // pred_check
        %p2814 = pneg %p2813
      $region42: #{tpu_custom_call.1} parent=5 // pred_check_branch
        %2816 = sbr.rel (%p2814) target = $region44
      $region43: #{tpu_custom_call.1} parent=5 // pred_region
        %s2817 = ssub.s32 %s15, 2
        // Predicated region
        $region45: #{tpu_custom_call.1} parent=43 // pred_check
          %p2818 = pneg %p91
        $region46: #{tpu_custom_call.1} parent=43 // pred_check_branch
          %2820 = sbr.rel (%p2818) target = $region48
        $region47: #{tpu_custom_call.1} parent=43 // pred_region
          %s2821 = sand.u32 %s76, 1
          %s2822 = scalar_lea.sflag [#allocation4], %s2821
          %s2823 = sand.u32 %s76, 1
          %s2824 = smul.addr %s2823, 128
          %s2825 = scalar_lea.vmem [#allocation7], %s2824
          %2826 = dma.done %s2822, 2048
        $region48: #{tpu_custom_call.1} parent=43 // pred_fallthru
          _
      $region44: #{tpu_custom_call.1} parent=5 // pred_fallthru
        _
    $region6: #{tpu_custom_call.1} parent=1 // loop_footer
      %s19 = sadd.s32 1, %s15
    $region7: #{tpu_custom_call.1} parent=1 // loop_footer_branch
      %14 = sbr.rel target = $region3
    $region8: #{tpu_custom_call.1} parent=1 // loop_exit
      _
    %2827 = vsyncpa [#allocation3], 1
    %s2828 = scalar_lea.sflag [#allocation3], 1
    %2829 = vsyncpa %s2828, 1
    %2830 = vsyncpa [#allocation6], 1
    %2831 = vsyncpa [#allocation4], 1
    %s2832 = scalar_lea.sflag [#allocation4], 1
    %2833 = vsyncpa %s2832, 1

</llo_original>
